<compile_context>
chip_gen: v7x
topology: tpu7x:2x2x1
jax: 0.10.0
libtpu: 0.0.40
codegen_flags: <defaults>
</compile_context>

<pallas_src>
import numpy as np
import jax
import jax.numpy as jnp
from jax import lax
from jax.experimental import pallas as pl
from jax.experimental.pallas import tpu as pltpu


def _round_up(x, m):
    return ((x + m - 1) // m) * m


# ----------------------------- Pallas kernel ------------------------------ #
def bigru_fused_kernel(x_ref, wcat_ref, bgi_ref, whh_ref, bghn_ref, lens_ref,
                       out_ref, gi_s):
    """Fused bidirectional GRU over the full (short) sequence.

    x_ref    : (T*Bp, Ep)   time-major embedded input (row t*Bp+b = x_t[b])
    wcat_ref : (Ep, 6Hp)    dense packed W_ih, columns [r_f|r_b|z_f|z_b|n_f|n_b]
    bgi_ref  : (1, 6Hp)     b_ih (all gates) + b_hh (r,z gates), same layout
    whh_ref  : (2Hp, 6Hp)   block-diagonal W_hh, rows [h_fwd | h_bwd]
    bghn_ref : (1, 2Hp)     b_hh for the n gate only, [n_f | n_b]
    lens_ref : (Bp, 1) i32  valid lengths (0 for padded batch rows)
    out_ref  : (T, Bp, 2Hp) row i = [fwd output at time i | bwd output at time T-1-i]
    gi_s     : (T, Bp, 6Hp) VMEM scratch holding the merged per-step projection
    """
    T, Bp, H2 = out_ref.shape
    Hp = H2 // 2
    H6 = 3 * H2
    f32 = jnp.float32

    # Input projection for all timesteps and BOTH directions: one dense MXU
    # pass (no zero blocks, no duplicated x), biases (b_ih + b_hh r/z) folded.
    gi_all = jnp.dot(x_ref[...], wcat_ref[...],
                     preferred_element_type=f32) + bgi_ref[...]        # (T*Bp, 6Hp)

    # Merge fwd columns of time i with bwd columns of time T-1-i into the
    # recurrence-step layout.  Lane-periodic select, done once, OFF the serial
    # chain, stored aligned so each step is a single vld.
    lane6 = lax.broadcasted_iota(jnp.int32, (1, H6), 1)
    fwd6 = (lane6 % H2) < Hp                                           # (1, 6Hp)
    for t in range(T):
        gf = gi_all[t * Bp:(t + 1) * Bp, :]                            # aligned slice
        gb = gi_all[(T - 1 - t) * Bp:(T - t) * Bp, :]
        gi_s[t] = jnp.where(fwd6, gf, gb)

    lane2 = lax.broadcasted_iota(jnp.int32, (1, H2), 1)
    fwd2 = lane2 < Hp                                                  # (1, 2Hp)
    lens_col = lens_ref[...]                                           # (Bp, 1)

    whh = whh_ref[...]
    bghn = bghn_ref[...]

    # Serial recurrence, fully unrolled (T is small and static); one matmul per
    # step covers both directions, all gate slices are 128-lane aligned.
    # TODO(synk): for production-length T add a time-chunk grid (h carried in a
    # VMEM scratch, lax.fori_loop(unroll=True) per chunk, pl.Buffered(2) input
    # specs) so the working set fits v7x's 64 MiB VMEM, and a "parallel" batch
    # grid axis / core_map to use both v7x TensorCores.
    h = jnp.zeros((Bp, H2), f32)                                       # [h_f | h_b]
    for i in range(T):
        j = T - 1 - i                                                  # bwd timestep
        gi = gi_s[i]                                                   # (Bp, 6Hp)
        gh = jnp.dot(h.astype(whh.dtype), whh, preferred_element_type=f32)

        r = jax.nn.sigmoid(gi[:, 0:H2] + gh[:, 0:H2])
        z = jax.nn.sigmoid(gi[:, H2:2 * H2] + gh[:, H2:2 * H2])
        n = jnp.tanh(gi[:, 2 * H2:3 * H2] + r * (gh[:, 2 * H2:3 * H2] + bghn))
        h_new = (1.0 - z) * n + z * h

        # validity: fwd half compares time i, bwd half compares time j
        valid = jnp.where(fwd2, i, j) < lens_col                       # (Bp, 2Hp) bool
        o = jnp.where(valid, h_new, 0.0)
        h = jnp.where(valid, h_new, h)

        # single lane-dense store per step
        out_ref[i] = o.astype(out_ref.dtype)


# --------------------------- Parameter packing ----------------------------- #
def pack_gru_params(wih, whh, bih, bhh, Hp, Ep, matmul_dtype=jnp.float32):
    """Repack (2, E, 3H)/(2, H, 3H)/(2, 1, 3H) PyTorch-layout GRU params (gate
    order r, z, n per direction) into the fused, hardware-padded layout."""
    E = wih.shape[1]
    H = whh.shape[1]
    f32 = jnp.float32
    wf, wb = wih[0].astype(f32), wih[1].astype(f32)      # (E, 3H)
    uf, ub = whh[0].astype(f32), whh[1].astype(f32)      # (H, 3H)
    bfi, bbi = bih[0].astype(f32), bih[1].astype(f32)    # (1, 3H)
    bfh, bbh = bhh[0].astype(f32), bhh[1].astype(f32)    # (1, 3H)

    def pw(w):   # (E, H) -> (Ep, Hp)
        return jnp.pad(w, ((0, Ep - E), (0, Hp - H)))

    def pu(u):   # (H, H) -> (Hp, Hp)
        return jnp.pad(u, ((0, Hp - H), (0, Hp - H)))

    def pb(b):   # (1, H) -> (1, Hp)
        return jnp.pad(b, ((0, 0), (0, Hp - H)))

    zHH = jnp.zeros((Hp, Hp), f32)

    # Dense packed W_ih, columns [r_f, r_b, z_f, z_b, n_f, n_b] (no zero blocks)
    wcat = jnp.concatenate([
        pw(wf[:, 0:H]), pw(wb[:, 0:H]),
        pw(wf[:, H:2 * H]), pw(wb[:, H:2 * H]),
        pw(wf[:, 2 * H:3 * H]), pw(wb[:, 2 * H:3 * H]),
    ], axis=1)                                            # (Ep, 6Hp)

    # Block-diagonal W_hh, rows [h_fwd | h_bwd]
    row_f = jnp.concatenate([pu(uf[:, 0:H]), zHH, pu(uf[:, H:2 * H]), zHH,
                             pu(uf[:, 2 * H:3 * H]), zHH], axis=1)
    row_b = jnp.concatenate([zHH, pu(ub[:, 0:H]), zHH, pu(ub[:, H:2 * H]),
                             zHH, pu(ub[:, 2 * H:3 * H])], axis=1)
    whhbd = jnp.concatenate([row_f, row_b], axis=0)       # (2Hp, 6Hp)

    # b_ih (all gates) + b_hh (r, z only) folded into the input projection.
    bgi = jnp.concatenate([
        pb(bfi[:, 0:H] + bfh[:, 0:H]),         pb(bbi[:, 0:H] + bbh[:, 0:H]),
        pb(bfi[:, H:2 * H] + bfh[:, H:2 * H]), pb(bbi[:, H:2 * H] + bbh[:, H:2 * H]),
        pb(bfi[:, 2 * H:3 * H]),               pb(bbi[:, 2 * H:3 * H]),
    ], axis=1)                                            # (1, 6Hp)

    # b_hh for the n gate stays inside r * (...): [n_f | n_b]
    bghn = jnp.concatenate([pb(bfh[:, 2 * H:3 * H]), pb(bbh[:, 2 * H:3 * H])],
                           axis=1)                        # (1, 2Hp)

    return wcat.astype(matmul_dtype), whhbd.astype(matmul_dtype), bgi, bghn


# ------------------------------- Wrapper ----------------------------------- #
def encoder_forward(seq, mask, emb_matrix, params, matmul_dtype=jnp.float32):
    """seq: (B, T) int32 ids, mask: (B, T) 0/1.  Returns (e, lens), e: (B, T, 2H).

    Outputs at t >= lens[b] are zero.  PyTorch's pad_packed_sequence truncates
    to max(lens); slice e[:, :int(lens.max())] outside jit for the same shape.
    Dropout is an inference-mode identity.
    """
    wih, whh, bih, bhh = params
    B, T = seq.shape
    E = emb_matrix.shape[1]
    H = whh.shape[1]

    # Hardware-tile padding: 2Hp multiple of 128 lanes, Bp multiple of 8
    # sublanes, Ep multiple of 128 lanes.
    Hp = _round_up(H, 64)
    Bp = _round_up(B, 8)
    Ep = _round_up(E, 128)

    lens = jnp.sum(mask, axis=1).astype(jnp.int32)                 # (B,)
    lens_p = jnp.pad(lens, (0, Bp - B)).reshape(Bp, 1)             # (Bp, 1)

    # Frozen pretrained embedding lookup + time-major layout.
    # TODO(synk): at production sizes, keep the table in HBM (memory_space=
    # pl.ANY) and gather rows inside the kernel via scalar-prefetched ids +
    # make_async_copy instead of this XLA gather.
    x = jnp.take(emb_matrix, seq, axis=0).astype(jnp.float32)      # (B, T, E)
    x_tm = jnp.transpose(x, (1, 0, 2))                             # (T, B, E)
    x_tm = jnp.pad(x_tm, ((0, 0), (0, Bp - B), (0, Ep - E)))       # (T, Bp, Ep)
    xp = x_tm.reshape(T * Bp, Ep).astype(matmul_dtype)

    wcat, whhbd, bgi, bghn = pack_gru_params(wih, whh, bih, bhh, Hp, Ep,
                                             matmul_dtype)

    vmem = pl.BlockSpec(memory_space=pltpu.MemorySpace.VMEM)
    out_tm = pl.pallas_call(
        bigru_fused_kernel,
        out_shape=jax.ShapeDtypeStruct((T, Bp, 2 * Hp), jnp.float32),
        in_specs=[vmem] * 6,
        out_specs=vmem,
        scratch_shapes=[pltpu.VMEM((T, Bp, 6 * Hp), jnp.float32)],
    )(xp, wcat, bgi, whhbd, bghn, lens_p)

    # Row i holds [fwd_i | bwd_{T-1-i}]: flip the bwd half's time axis and drop
    # the padding.  (Cheap XLA reverse/concat/transpose; outputs at padded
    # timesteps are already zero.)
    fwd = out_tm[:, :B, :H]                                        # (T, B, H)
    bwd = out_tm[::-1, :B, Hp:Hp + H]                              # (T, B, H)
    e = jnp.transpose(jnp.concatenate([fwd, bwd], axis=-1), (1, 0, 2))
    return e, lens


# --------------------------- NumPy reference -------------------------------- #
def _sigmoid(x):
    return 1.0 / (1.0 + np.exp(-x))


def _gru_dir_ref(x, lens, wih, whh, bih, bhh, reverse):
    B, T, E = x.shape
    H = whh.shape[0]
    h = np.zeros((B, H), np.float32)
    out = np.zeros((B, T, H), np.float32)
    order = range(T - 1, -1, -1) if reverse else range(T)
    for t in order:
        gi = x[:, t] @ wih + bih
        gh = h @ whh + bhh
        r = _sigmoid(gi[:, 0:H] + gh[:, 0:H])
        z = _sigmoid(gi[:, H:2 * H] + gh[:, H:2 * H])
        n = np.tanh(gi[:, 2 * H:3 * H] + r * gh[:, 2 * H:3 * H])
        h_new = (1.0 - z) * n + z * h
        valid = (t < lens)[:, None]
        out[:, t] = np.where(valid, h_new, 0.0)
        h = np.where(valid, h_new, h)
    return out


def encoder_ref(seq, mask, emb_matrix, params):
    wih, whh, bih, bhh = (np.asarray(p, np.float32) for p in params)
    emb = np.asarray(emb_matrix, np.float32)
    seq = np.asarray(seq)
    lens = np.asarray(mask).sum(1).astype(np.int32)
    x = emb[seq]                                                   # (B, T, E)
    of = _gru_dir_ref(x, lens, wih[0], whh[0], bih[0, 0], bhh[0, 0], reverse=False)
    ob = _gru_dir_ref(x, lens, wih[1], whh[1], bih[1, 0], bhh[1, 0], reverse=True)
    e = np.concatenate([of, ob], axis=-1)
    t_out = int(lens.max())
    return e[:, :t_out, :]


# --------------------------------- Main ------------------------------------- #
if __name__ == "__main__":
    B, T = 2, 8
    vocab, E, H = 20, 32, 32

    key = jax.random.PRNGKey(0)
    k_emb, k_wih, k_whh, k_bih, k_bhh, k_seq = jax.random.split(key, 6)

    # Deterministic "pretrained" embedding and GRU parameters
    emb_matrix = jax.random.normal(k_emb, (vocab, E), jnp.float32) * 0.5
    bound = 1.0 / np.sqrt(H)
    # stored pre-transposed: (2 dirs, in_dim, 3H); PyTorch gate order r, z, n
    wih = jax.random.uniform(k_wih, (2, E, 3 * H), jnp.float32, -bound, bound)
    whh = jax.random.uniform(k_whh, (2, H, 3 * H), jnp.float32, -bound, bound)
    bih = jax.random.uniform(k_bih, (2, 1, 3 * H), jnp.float32, -bound, bound)
    bhh = jax.random.uniform(k_bhh, (2, 1, 3 * H), jnp.float32, -bound, bound)
    params = (wih, whh, bih, bhh)

    # Inputs: token ids + padding mask (variable lengths)
    seq = jax.random.randint(k_seq, (B, T), 0, vocab, jnp.int32)
    mask_np = np.zeros((B, T), np.int32)
    mask_np[0, :8] = 1   # length 8
    mask_np[1, :5] = 1   # length 5
    mask = jnp.asarray(mask_np)

    e_full, lens = encoder_forward(seq, mask, emb_matrix, params)
    e_full = jax.block_until_ready(e_full)

    # pad_packed_sequence truncates to the max length in the batch
    t_out = int(np.asarray(lens).max())
    e = np.asarray(e_full)[:, :t_out, :]                           # (B, T_out, 2H)

    e_ref = encoder_ref(seq, mask, emb_matrix, params)
    assert e.shape == e_ref.shape == (B, t_out, 2 * H), (e.shape, e_ref.shape)
    assert np.allclose(e, e_ref, atol=1e-2, rtol=1e-2), \
        f"max abs err {np.abs(e - e_ref).max()}"

    print("KERNEL_OK")
</pallas_src>

<mosaic_0001>
module attributes {stable_mosaic.version = 11 : i64} {
  func.func @bigru_fused_kernel(%arg0: memref<64x128xf32, #tpu.memory_space<vmem>>, %arg1: memref<128x384xf32, #tpu.memory_space<vmem>>, %arg2: memref<1x384xf32, #tpu.memory_space<vmem>>, %arg3: memref<128x384xf32, #tpu.memory_space<vmem>>, %arg4: memref<1x128xf32, #tpu.memory_space<vmem>>, %arg5: memref<8x1xi32, #tpu.memory_space<vmem>>, %arg6: memref<8x8x128xf32, #tpu.memory_space<vmem>>, %arg7: memref<8x8x384xf32, #tpu.memory_space<vmem>>) attributes {dimension_semantics = [], scalar_prefetch = 0 : i64, scratch_operands = 1 : i64, tpu.core_type = #tpu.core_type<tc>} {
    %c0 = arith.constant 0 : index
    %c0_0 = arith.constant 0 : index
    %0 = vector.load %arg0[%c0, %c0_0] : memref<64x128xf32, #tpu.memory_space<vmem>>, vector<64x128xf32>
    %c0_1 = arith.constant 0 : index
    %c0_2 = arith.constant 0 : index
    %1 = vector.load %arg1[%c0_1, %c0_2] : memref<128x384xf32, #tpu.memory_space<vmem>>, vector<128x384xf32>
    %cst = arith.constant dense<0.000000e+00> : vector<64x384xf32>
    %2 = tpu.matmul %0, %1, %cst {dimension_numbers = #tpu.dot_dimension_numbers<[1], [0], [0], [1], [0, 0, 1, 1], [], []>} : vector<64x128xf32>, vector<128x384xf32>, vector<64x384xf32> -> vector<64x384xf32>
    %c0_3 = arith.constant 0 : index
    %c0_4 = arith.constant 0 : index
    %3 = vector.load %arg2[%c0_3, %c0_4] : memref<1x384xf32, #tpu.memory_space<vmem>>, vector<1x384xf32>
    %4 = vector.broadcast %3 : vector<1x384xf32> to vector<64x384xf32>
    %5 = arith.addf %2, %4 : vector<64x384xf32>
    %6 = tpu.iota {dimensions = array<i32: 1>} : vector<1x384xi32>
    %c128_i32 = arith.constant 128 : i32
    %c0_i32 = arith.constant 0 : i32
    %7 = arith.cmpi eq, %c128_i32, %c0_i32 : i32
    %c1_i32 = arith.constant 1 : i32
    %8 = arith.select %7, %c1_i32, %c128_i32 : i32
    %9 = vector.broadcast %8 : i32 to vector<1x384xi32>
    %10 = arith.remsi %6, %9 : vector<1x384xi32>
    %c0_i32_5 = arith.constant 0 : i32
    %11 = vector.broadcast %c0_i32_5 : i32 to vector<1x384xi32>
    %12 = arith.cmpi ne, %10, %11 : vector<1x384xi32>
    %c0_i32_6 = arith.constant 0 : i32
    %13 = vector.broadcast %c0_i32_6 : i32 to vector<1x384xi32>
    %14 = arith.cmpi slt, %10, %13 : vector<1x384xi32>
    %c0_i32_7 = arith.constant 0 : i32
    %15 = arith.cmpi slt, %8, %c0_i32_7 : i32
    %16 = vector.broadcast %15 : i1 to vector<1x384xi1>
    %17 = vector.broadcast %16 : vector<1x384xi1> to vector<1x384xi1>
    %18 = arith.xori %14, %17 : vector<1x384xi1>
    %19 = arith.andi %18, %12 : vector<1x384xi1>
    %20 = vector.broadcast %8 : i32 to vector<1x384xi32>
    %21 = arith.addi %10, %20 : vector<1x384xi32>
    %22 = arith.select %19, %21, %10 : vector<1x384xi1>, vector<1x384xi32>
    %c64_i32 = arith.constant 64 : i32
    %23 = vector.broadcast %c64_i32 : i32 to vector<1x384xi32>
    %24 = arith.cmpi slt, %22, %23 : vector<1x384xi32>
    %25 = vector.extract_strided_slice %5 {offsets = [0, 0], sizes = [8, 384], strides = [1, 1]} : vector<64x384xf32> to vector<8x384xf32>
    %26 = vector.extract_strided_slice %5 {offsets = [56, 0], sizes = [8, 384], strides = [1, 1]} : vector<64x384xf32> to vector<8x384xf32>
    %27 = vector.shape_cast %24 : vector<1x384xi1> to vector<1x384xi1>
    %28 = vector.broadcast %27 : vector<1x384xi1> to vector<8x384xi1>
    %29 = arith.select %28, %25, %26 : vector<8x384xi1>, vector<8x384xf32>
    %c0_8 = arith.constant 0 : index
    %c0_9 = arith.constant 0 : index
    %c0_10 = arith.constant 0 : index
    %30 = vector.load %arg7[%c0_8, %c0_9, %c0_10] : memref<8x8x384xf32, #tpu.memory_space<vmem>>, vector<1x8x384xf32>
    %31 = vector.shape_cast %30 : vector<1x8x384xf32> to vector<8x384xf32>
    %32 = vector.shape_cast %29 : vector<8x384xf32> to vector<1x8x384xf32>
    tpu.vector_store %arg7[%c0_8, %c0_9, %c0_10], %32 {strides = array<i32>} : memref<8x8x384xf32, #tpu.memory_space<vmem>>, vector<1x8x384xf32>,
    %33 = vector.extract_strided_slice %5 {offsets = [8, 0], sizes = [8, 384], strides = [1, 1]} : vector<64x384xf32> to vector<8x384xf32>
    %34 = vector.extract_strided_slice %5 {offsets = [48, 0], sizes = [8, 384], strides = [1, 1]} : vector<64x384xf32> to vector<8x384xf32>
    %35 = vector.shape_cast %24 : vector<1x384xi1> to vector<1x384xi1>
    %36 = vector.broadcast %35 : vector<1x384xi1> to vector<8x384xi1>
    %37 = arith.select %36, %33, %34 : vector<8x384xi1>, vector<8x384xf32>
    %c1 = arith.constant 1 : index
    %c0_11 = arith.constant 0 : index
    %c0_12 = arith.constant 0 : index
    %38 = vector.load %arg7[%c1, %c0_11, %c0_12] : memref<8x8x384xf32, #tpu.memory_space<vmem>>, vector<1x8x384xf32>
    %39 = vector.shape_cast %38 : vector<1x8x384xf32> to vector<8x384xf32>
    %40 = vector.shape_cast %37 : vector<8x384xf32> to vector<1x8x384xf32>
    tpu.vector_store %arg7[%c1, %c0_11, %c0_12], %40 {strides = array<i32>} : memref<8x8x384xf32, #tpu.memory_space<vmem>>, vector<1x8x384xf32>,
    %41 = vector.extract_strided_slice %5 {offsets = [16, 0], sizes = [8, 384], strides = [1, 1]} : vector<64x384xf32> to vector<8x384xf32>
    %42 = vector.extract_strided_slice %5 {offsets = [40, 0], sizes = [8, 384], strides = [1, 1]} : vector<64x384xf32> to vector<8x384xf32>
    %43 = vector.shape_cast %24 : vector<1x384xi1> to vector<1x384xi1>
    %44 = vector.broadcast %43 : vector<1x384xi1> to vector<8x384xi1>
    %45 = arith.select %44, %41, %42 : vector<8x384xi1>, vector<8x384xf32>
    %c2 = arith.constant 2 : index
    %c0_13 = arith.constant 0 : index
    %c0_14 = arith.constant 0 : index
    %46 = vector.load %arg7[%c2, %c0_13, %c0_14] : memref<8x8x384xf32, #tpu.memory_space<vmem>>, vector<1x8x384xf32>
    %47 = vector.shape_cast %46 : vector<1x8x384xf32> to vector<8x384xf32>
    %48 = vector.shape_cast %45 : vector<8x384xf32> to vector<1x8x384xf32>
    tpu.vector_store %arg7[%c2, %c0_13, %c0_14], %48 {strides = array<i32>} : memref<8x8x384xf32, #tpu.memory_space<vmem>>, vector<1x8x384xf32>,
    %49 = vector.extract_strided_slice %5 {offsets = [24, 0], sizes = [8, 384], strides = [1, 1]} : vector<64x384xf32> to vector<8x384xf32>
    %50 = vector.extract_strided_slice %5 {offsets = [32, 0], sizes = [8, 384], strides = [1, 1]} : vector<64x384xf32> to vector<8x384xf32>
    %51 = vector.shape_cast %24 : vector<1x384xi1> to vector<1x384xi1>
    %52 = vector.broadcast %51 : vector<1x384xi1> to vector<8x384xi1>
    %53 = arith.select %52, %49, %50 : vector<8x384xi1>, vector<8x384xf32>
    %c3 = arith.constant 3 : index
    %c0_15 = arith.constant 0 : index
    %c0_16 = arith.constant 0 : index
    %54 = vector.load %arg7[%c3, %c0_15, %c0_16] : memref<8x8x384xf32, #tpu.memory_space<vmem>>, vector<1x8x384xf32>
    %55 = vector.shape_cast %54 : vector<1x8x384xf32> to vector<8x384xf32>
    %56 = vector.shape_cast %53 : vector<8x384xf32> to vector<1x8x384xf32>
    tpu.vector_store %arg7[%c3, %c0_15, %c0_16], %56 {strides = array<i32>} : memref<8x8x384xf32, #tpu.memory_space<vmem>>, vector<1x8x384xf32>,
    %57 = vector.extract_strided_slice %5 {offsets = [32, 0], sizes = [8, 384], strides = [1, 1]} : vector<64x384xf32> to vector<8x384xf32>
    %58 = vector.extract_strided_slice %5 {offsets = [24, 0], sizes = [8, 384], strides = [1, 1]} : vector<64x384xf32> to vector<8x384xf32>
    %59 = vector.shape_cast %24 : vector<1x384xi1> to vector<1x384xi1>
    %60 = vector.broadcast %59 : vector<1x384xi1> to vector<8x384xi1>
    %61 = arith.select %60, %57, %58 : vector<8x384xi1>, vector<8x384xf32>
    %c4 = arith.constant 4 : index
    %c0_17 = arith.constant 0 : index
    %c0_18 = arith.constant 0 : index
    %62 = vector.load %arg7[%c4, %c0_17, %c0_18] : memref<8x8x384xf32, #tpu.memory_space<vmem>>, vector<1x8x384xf32>
    %63 = vector.shape_cast %62 : vector<1x8x384xf32> to vector<8x384xf32>
    %64 = vector.shape_cast %61 : vector<8x384xf32> to vector<1x8x384xf32>
    tpu.vector_store %arg7[%c4, %c0_17, %c0_18], %64 {strides = array<i32>} : memref<8x8x384xf32, #tpu.memory_space<vmem>>, vector<1x8x384xf32>,
    %65 = vector.extract_strided_slice %5 {offsets = [40, 0], sizes = [8, 384], strides = [1, 1]} : vector<64x384xf32> to vector<8x384xf32>
    %66 = vector.extract_strided_slice %5 {offsets = [16, 0], sizes = [8, 384], strides = [1, 1]} : vector<64x384xf32> to vector<8x384xf32>
    %67 = vector.shape_cast %24 : vector<1x384xi1> to vector<1x384xi1>
    %68 = vector.broadcast %67 : vector<1x384xi1> to vector<8x384xi1>
    %69 = arith.select %68, %65, %66 : vector<8x384xi1>, vector<8x384xf32>
    %c5 = arith.constant 5 : index
    %c0_19 = arith.constant 0 : index
    %c0_20 = arith.constant 0 : index
    %70 = vector.load %arg7[%c5, %c0_19, %c0_20] : memref<8x8x384xf32, #tpu.memory_space<vmem>>, vector<1x8x384xf32>
    %71 = vector.shape_cast %70 : vector<1x8x384xf32> to vector<8x384xf32>
    %72 = vector.shape_cast %69 : vector<8x384xf32> to vector<1x8x384xf32>
    tpu.vector_store %arg7[%c5, %c0_19, %c0_20], %72 {strides = array<i32>} : memref<8x8x384xf32, #tpu.memory_space<vmem>>, vector<1x8x384xf32>,
    %73 = vector.extract_strided_slice %5 {offsets = [48, 0], sizes = [8, 384], strides = [1, 1]} : vector<64x384xf32> to vector<8x384xf32>
    %74 = vector.extract_strided_slice %5 {offsets = [8, 0], sizes = [8, 384], strides = [1, 1]} : vector<64x384xf32> to vector<8x384xf32>
    %75 = vector.shape_cast %24 : vector<1x384xi1> to vector<1x384xi1>
    %76 = vector.broadcast %75 : vector<1x384xi1> to vector<8x384xi1>
    %77 = arith.select %76, %73, %74 : vector<8x384xi1>, vector<8x384xf32>
    %c6 = arith.constant 6 : index
    %c0_21 = arith.constant 0 : index
    %c0_22 = arith.constant 0 : index
    %78 = vector.load %arg7[%c6, %c0_21, %c0_22] : memref<8x8x384xf32, #tpu.memory_space<vmem>>, vector<1x8x384xf32>
    %79 = vector.shape_cast %78 : vector<1x8x384xf32> to vector<8x384xf32>
    %80 = vector.shape_cast %77 : vector<8x384xf32> to vector<1x8x384xf32>
    tpu.vector_store %arg7[%c6, %c0_21, %c0_22], %80 {strides = array<i32>} : memref<8x8x384xf32, #tpu.memory_space<vmem>>, vector<1x8x384xf32>,
    %81 = vector.extract_strided_slice %5 {offsets = [56, 0], sizes = [8, 384], strides = [1, 1]} : vector<64x384xf32> to vector<8x384xf32>
    %82 = vector.extract_strided_slice %5 {offsets = [0, 0], sizes = [8, 384], strides = [1, 1]} : vector<64x384xf32> to vector<8x384xf32>
    %83 = vector.shape_cast %24 : vector<1x384xi1> to vector<1x384xi1>
    %84 = vector.broadcast %83 : vector<1x384xi1> to vector<8x384xi1>
    %85 = arith.select %84, %81, %82 : vector<8x384xi1>, vector<8x384xf32>
    %c7 = arith.constant 7 : index
    %c0_23 = arith.constant 0 : index
    %c0_24 = arith.constant 0 : index
    %86 = vector.load %arg7[%c7, %c0_23, %c0_24] : memref<8x8x384xf32, #tpu.memory_space<vmem>>, vector<1x8x384xf32>
    %87 = vector.shape_cast %86 : vector<1x8x384xf32> to vector<8x384xf32>
    %88 = vector.shape_cast %85 : vector<8x384xf32> to vector<1x8x384xf32>
    tpu.vector_store %arg7[%c7, %c0_23, %c0_24], %88 {strides = array<i32>} : memref<8x8x384xf32, #tpu.memory_space<vmem>>, vector<1x8x384xf32>,
    %89 = tpu.iota {dimensions = array<i32: 1>} : vector<1x128xi32>
    %c64_i32_25 = arith.constant 64 : i32
    %90 = vector.broadcast %c64_i32_25 : i32 to vector<1x128xi32>
    %91 = arith.cmpi slt, %89, %90 : vector<1x128xi32>
    %c0_26 = arith.constant 0 : index
    %c0_27 = arith.constant 0 : index
    %92 = vector.load %arg5[%c0_26, %c0_27] : memref<8x1xi32, #tpu.memory_space<vmem>>, vector<8x1xi32>
    %c0_28 = arith.constant 0 : index
    %c0_29 = arith.constant 0 : index
    %93 = vector.load %arg3[%c0_28, %c0_29] : memref<128x384xf32, #tpu.memory_space<vmem>>, vector<128x384xf32>
    %c0_30 = arith.constant 0 : index
    %c0_31 = arith.constant 0 : index
    %94 = vector.load %arg4[%c0_30, %c0_31] : memref<1x128xf32, #tpu.memory_space<vmem>>, vector<1x128xf32>
    %cst_32 = arith.constant 0.000000e+00 : f32
    %95 = vector.broadcast %cst_32 : f32 to vector<8x128xf32>
    %c0_33 = arith.constant 0 : index
    %c0_34 = arith.constant 0 : index
    %c0_35 = arith.constant 0 : index
    %96 = vector.load %arg7[%c0_33, %c0_34, %c0_35] : memref<8x8x384xf32, #tpu.memory_space<vmem>>, vector<1x8x384xf32>
    %97 = vector.shape_cast %96 : vector<1x8x384xf32> to vector<8x384xf32>
    %cst_36 = arith.constant dense<0.000000e+00> : vector<8x384xf32>
    %98 = tpu.matmul %95, %93, %cst_36 {dimension_numbers = #tpu.dot_dimension_numbers<[1], [0], [0], [1], [0, 0, 1, 1], [], []>} : vector<8x128xf32>, vector<128x384xf32>, vector<8x384xf32> -> vector<8x384xf32>
    %99 = vector.extract_strided_slice %97 {offsets = [0, 0], sizes = [8, 128], strides = [1, 1]} : vector<8x384xf32> to vector<8x128xf32>
    %100 = vector.extract_strided_slice %98 {offsets = [0, 0], sizes = [8, 128], strides = [1, 1]} : vector<8x384xf32> to vector<8x128xf32>
    %101 = arith.addf %99, %100 : vector<8x128xf32>
    %102 = arith.negf %101 : vector<8x128xf32>
    %103 = math.exp %102 : vector<8x128xf32>
    %cst_37 = arith.constant 1.000000e+00 : f32
    %104 = vector.broadcast %cst_37 : f32 to vector<8x128xf32>
    %105 = arith.addf %104, %103 : vector<8x128xf32>
    %106 = arith.divf %104, %105 : vector<8x128xf32>
    %107 = vector.extract_strided_slice %97 {offsets = [0, 128], sizes = [8, 128], strides = [1, 1]} : vector<8x384xf32> to vector<8x128xf32>
    %108 = vector.extract_strided_slice %98 {offsets = [0, 128], sizes = [8, 128], strides = [1, 1]} : vector<8x384xf32> to vector<8x128xf32>
    %109 = arith.addf %107, %108 : vector<8x128xf32>
    %110 = arith.negf %109 : vector<8x128xf32>
    %111 = math.exp %110 : vector<8x128xf32>
    %cst_38 = arith.constant 1.000000e+00 : f32
    %112 = vector.broadcast %cst_38 : f32 to vector<8x128xf32>
    %113 = arith.addf %112, %111 : vector<8x128xf32>
    %114 = arith.divf %112, %113 : vector<8x128xf32>
    %115 = vector.extract_strided_slice %97 {offsets = [0, 256], sizes = [8, 128], strides = [1, 1]} : vector<8x384xf32> to vector<8x128xf32>
    %116 = vector.extract_strided_slice %98 {offsets = [0, 256], sizes = [8, 128], strides = [1, 1]} : vector<8x384xf32> to vector<8x128xf32>
    %117 = vector.broadcast %94 : vector<1x128xf32> to vector<8x128xf32>
    %118 = arith.addf %116, %117 : vector<8x128xf32>
    %119 = arith.mulf %106, %118 : vector<8x128xf32>
    %120 = arith.addf %115, %119 : vector<8x128xf32>
    %121 = math.tanh %120 : vector<8x128xf32>
    %cst_39 = arith.constant 1.000000e+00 : f32
    %122 = vector.broadcast %cst_39 : f32 to vector<8x128xf32>
    %123 = arith.subf %122, %114 : vector<8x128xf32>
    %124 = arith.mulf %123, %121 : vector<8x128xf32>
    %125 = arith.mulf %114, %95 : vector<8x128xf32>
    %126 = arith.addf %124, %125 : vector<8x128xf32>
    %c0_i32_40 = arith.constant 0 : i32
    %c7_i32 = arith.constant 7 : i32
    %127 = vector.broadcast %c0_i32_40 : i32 to vector<1x128xi32>
    %128 = vector.broadcast %c7_i32 : i32 to vector<1x128xi32>
    %129 = arith.select %91, %127, %128 : vector<1x128xi1>, vector<1x128xi32>
    %130 = vector.broadcast %129 : vector<1x128xi32> to vector<8x128xi32>
    %131 = vector.broadcast %92 : vector<8x1xi32> to vector<8x128xi32>
    %132 = arith.cmpi slt, %130, %131 : vector<8x128xi32>
    %cst_41 = arith.constant 0.000000e+00 : f32
    %133 = vector.broadcast %cst_41 : f32 to vector<8x128xf32>
    %134 = arith.select %132, %126, %133 : vector<8x128xi1>, vector<8x128xf32>
    %135 = arith.select %132, %126, %95 : vector<8x128xi1>, vector<8x128xf32>
    %c0_42 = arith.constant 0 : index
    %c0_43 = arith.constant 0 : index
    %c0_44 = arith.constant 0 : index
    %136 = vector.load %arg6[%c0_42, %c0_43, %c0_44] : memref<8x8x128xf32, #tpu.memory_space<vmem>>, vector<1x8x128xf32>
    %137 = vector.shape_cast %136 : vector<1x8x128xf32> to vector<8x128xf32>
    %138 = vector.shape_cast %134 : vector<8x128xf32> to vector<1x8x128xf32>
    tpu.vector_store %arg6[%c0_42, %c0_43, %c0_44], %138 {strides = array<i32>} : memref<8x8x128xf32, #tpu.memory_space<vmem>>, vector<1x8x128xf32>,
    %c1_45 = arith.constant 1 : index
    %c0_46 = arith.constant 0 : index
    %c0_47 = arith.constant 0 : index
    %139 = vector.load %arg7[%c1_45, %c0_46, %c0_47] : memref<8x8x384xf32, #tpu.memory_space<vmem>>, vector<1x8x384xf32>
    %140 = vector.shape_cast %139 : vector<1x8x384xf32> to vector<8x384xf32>
    %cst_48 = arith.constant dense<0.000000e+00> : vector<8x384xf32>
    %141 = tpu.matmul %135, %93, %cst_48 {dimension_numbers = #tpu.dot_dimension_numbers<[1], [0], [0], [1], [0, 0, 1, 1], [], []>} : vector<8x128xf32>, vector<128x384xf32>, vector<8x384xf32> -> vector<8x384xf32>
    %142 = vector.extract_strided_slice %140 {offsets = [0, 0], sizes = [8, 128], strides = [1, 1]} : vector<8x384xf32> to vector<8x128xf32>
    %143 = vector.extract_strided_slice %141 {offsets = [0, 0], sizes = [8, 128], strides = [1, 1]} : vector<8x384xf32> to vector<8x128xf32>
    %144 = arith.addf %142, %143 : vector<8x128xf32>
    %145 = arith.negf %144 : vector<8x128xf32>
    %146 = math.exp %145 : vector<8x128xf32>
    %cst_49 = arith.constant 1.000000e+00 : f32
    %147 = vector.broadcast %cst_49 : f32 to vector<8x128xf32>
    %148 = arith.addf %147, %146 : vector<8x128xf32>
    %149 = arith.divf %147, %148 : vector<8x128xf32>
    %150 = vector.extract_strided_slice %140 {offsets = [0, 128], sizes = [8, 128], strides = [1, 1]} : vector<8x384xf32> to vector<8x128xf32>
    %151 = vector.extract_strided_slice %141 {offsets = [0, 128], sizes = [8, 128], strides = [1, 1]} : vector<8x384xf32> to vector<8x128xf32>
    %152 = arith.addf %150, %151 : vector<8x128xf32>
    %153 = arith.negf %152 : vector<8x128xf32>
    %154 = math.exp %153 : vector<8x128xf32>
    %cst_50 = arith.constant 1.000000e+00 : f32
    %155 = vector.broadcast %cst_50 : f32 to vector<8x128xf32>
    %156 = arith.addf %155, %154 : vector<8x128xf32>
    %157 = arith.divf %155, %156 : vector<8x128xf32>
    %158 = vector.extract_strided_slice %140 {offsets = [0, 256], sizes = [8, 128], strides = [1, 1]} : vector<8x384xf32> to vector<8x128xf32>
    %159 = vector.extract_strided_slice %141 {offsets = [0, 256], sizes = [8, 128], strides = [1, 1]} : vector<8x384xf32> to vector<8x128xf32>
    %160 = vector.broadcast %94 : vector<1x128xf32> to vector<8x128xf32>
    %161 = arith.addf %159, %160 : vector<8x128xf32>
    %162 = arith.mulf %149, %161 : vector<8x128xf32>
    %163 = arith.addf %158, %162 : vector<8x128xf32>
    %164 = math.tanh %163 : vector<8x128xf32>
    %cst_51 = arith.constant 1.000000e+00 : f32
    %165 = vector.broadcast %cst_51 : f32 to vector<8x128xf32>
    %166 = arith.subf %165, %157 : vector<8x128xf32>
    %167 = arith.mulf %166, %164 : vector<8x128xf32>
    %168 = arith.mulf %157, %135 : vector<8x128xf32>
    %169 = arith.addf %167, %168 : vector<8x128xf32>
    %c1_i32_52 = arith.constant 1 : i32
    %c6_i32 = arith.constant 6 : i32
    %170 = vector.broadcast %c1_i32_52 : i32 to vector<1x128xi32>
    %171 = vector.broadcast %c6_i32 : i32 to vector<1x128xi32>
    %172 = arith.select %91, %170, %171 : vector<1x128xi1>, vector<1x128xi32>
    %173 = vector.broadcast %172 : vector<1x128xi32> to vector<8x128xi32>
    %174 = vector.broadcast %92 : vector<8x1xi32> to vector<8x128xi32>
    %175 = arith.cmpi slt, %173, %174 : vector<8x128xi32>
    %cst_53 = arith.constant 0.000000e+00 : f32
    %176 = vector.broadcast %cst_53 : f32 to vector<8x128xf32>
    %177 = arith.select %175, %169, %176 : vector<8x128xi1>, vector<8x128xf32>
    %178 = arith.select %175, %169, %135 : vector<8x128xi1>, vector<8x128xf32>
    %c1_54 = arith.constant 1 : index
    %c0_55 = arith.constant 0 : index
    %c0_56 = arith.constant 0 : index
    %179 = vector.load %arg6[%c1_54, %c0_55, %c0_56] : memref<8x8x128xf32, #tpu.memory_space<vmem>>, vector<1x8x128xf32>
    %180 = vector.shape_cast %179 : vector<1x8x128xf32> to vector<8x128xf32>
    %181 = vector.shape_cast %177 : vector<8x128xf32> to vector<1x8x128xf32>
    tpu.vector_store %arg6[%c1_54, %c0_55, %c0_56], %181 {strides = array<i32>} : memref<8x8x128xf32, #tpu.memory_space<vmem>>, vector<1x8x128xf32>,
    %c2_57 = arith.constant 2 : index
    %c0_58 = arith.constant 0 : index
    %c0_59 = arith.constant 0 : index
    %182 = vector.load %arg7[%c2_57, %c0_58, %c0_59] : memref<8x8x384xf32, #tpu.memory_space<vmem>>, vector<1x8x384xf32>
    %183 = vector.shape_cast %182 : vector<1x8x384xf32> to vector<8x384xf32>
    %cst_60 = arith.constant dense<0.000000e+00> : vector<8x384xf32>
    %184 = tpu.matmul %178, %93, %cst_60 {dimension_numbers = #tpu.dot_dimension_numbers<[1], [0], [0], [1], [0, 0, 1, 1], [], []>} : vector<8x128xf32>, vector<128x384xf32>, vector<8x384xf32> -> vector<8x384xf32>
    %185 = vector.extract_strided_slice %183 {offsets = [0, 0], sizes = [8, 128], strides = [1, 1]} : vector<8x384xf32> to vector<8x128xf32>
    %186 = vector.extract_strided_slice %184 {offsets = [0, 0], sizes = [8, 128], strides = [1, 1]} : vector<8x384xf32> to vector<8x128xf32>
    %187 = arith.addf %185, %186 : vector<8x128xf32>
    %188 = arith.negf %187 : vector<8x128xf32>
    %189 = math.exp %188 : vector<8x128xf32>
    %cst_61 = arith.constant 1.000000e+00 : f32
    %190 = vector.broadcast %cst_61 : f32 to vector<8x128xf32>
    %191 = arith.addf %190, %189 : vector<8x128xf32>
    %192 = arith.divf %190, %191 : vector<8x128xf32>
    %193 = vector.extract_strided_slice %183 {offsets = [0, 128], sizes = [8, 128], strides = [1, 1]} : vector<8x384xf32> to vector<8x128xf32>
    %194 = vector.extract_strided_slice %184 {offsets = [0, 128], sizes = [8, 128], strides = [1, 1]} : vector<8x384xf32> to vector<8x128xf32>
    %195 = arith.addf %193, %194 : vector<8x128xf32>
    %196 = arith.negf %195 : vector<8x128xf32>
    %197 = math.exp %196 : vector<8x128xf32>
    %cst_62 = arith.constant 1.000000e+00 : f32
    %198 = vector.broadcast %cst_62 : f32 to vector<8x128xf32>
    %199 = arith.addf %198, %197 : vector<8x128xf32>
    %200 = arith.divf %198, %199 : vector<8x128xf32>
    %201 = vector.extract_strided_slice %183 {offsets = [0, 256], sizes = [8, 128], strides = [1, 1]} : vector<8x384xf32> to vector<8x128xf32>
    %202 = vector.extract_strided_slice %184 {offsets = [0, 256], sizes = [8, 128], strides = [1, 1]} : vector<8x384xf32> to vector<8x128xf32>
    %203 = vector.broadcast %94 : vector<1x128xf32> to vector<8x128xf32>
    %204 = arith.addf %202, %203 : vector<8x128xf32>
    %205 = arith.mulf %192, %204 : vector<8x128xf32>
    %206 = arith.addf %201, %205 : vector<8x128xf32>
    %207 = math.tanh %206 : vector<8x128xf32>
    %cst_63 = arith.constant 1.000000e+00 : f32
    %208 = vector.broadcast %cst_63 : f32 to vector<8x128xf32>
    %209 = arith.subf %208, %200 : vector<8x128xf32>
    %210 = arith.mulf %209, %207 : vector<8x128xf32>
    %211 = arith.mulf %200, %178 : vector<8x128xf32>
    %212 = arith.addf %210, %211 : vector<8x128xf32>
    %c2_i32 = arith.constant 2 : i32
    %c5_i32 = arith.constant 5 : i32
    %213 = vector.broadcast %c2_i32 : i32 to vector<1x128xi32>
    %214 = vector.broadcast %c5_i32 : i32 to vector<1x128xi32>
    %215 = arith.select %91, %213, %214 : vector<1x128xi1>, vector<1x128xi32>
    %216 = vector.broadcast %215 : vector<1x128xi32> to vector<8x128xi32>
    %217 = vector.broadcast %92 : vector<8x1xi32> to vector<8x128xi32>
    %218 = arith.cmpi slt, %216, %217 : vector<8x128xi32>
    %cst_64 = arith.constant 0.000000e+00 : f32
    %219 = vector.broadcast %cst_64 : f32 to vector<8x128xf32>
    %220 = arith.select %218, %212, %219 : vector<8x128xi1>, vector<8x128xf32>
    %221 = arith.select %218, %212, %178 : vector<8x128xi1>, vector<8x128xf32>
    %c2_65 = arith.constant 2 : index
    %c0_66 = arith.constant 0 : index
    %c0_67 = arith.constant 0 : index
    %222 = vector.load %arg6[%c2_65, %c0_66, %c0_67] : memref<8x8x128xf32, #tpu.memory_space<vmem>>, vector<1x8x128xf32>
    %223 = vector.shape_cast %222 : vector<1x8x128xf32> to vector<8x128xf32>
    %224 = vector.shape_cast %220 : vector<8x128xf32> to vector<1x8x128xf32>
    tpu.vector_store %arg6[%c2_65, %c0_66, %c0_67], %224 {strides = array<i32>} : memref<8x8x128xf32, #tpu.memory_space<vmem>>, vector<1x8x128xf32>,
    %c3_68 = arith.constant 3 : index
    %c0_69 = arith.constant 0 : index
    %c0_70 = arith.constant 0 : index
    %225 = vector.load %arg7[%c3_68, %c0_69, %c0_70] : memref<8x8x384xf32, #tpu.memory_space<vmem>>, vector<1x8x384xf32>
    %226 = vector.shape_cast %225 : vector<1x8x384xf32> to vector<8x384xf32>
    %cst_71 = arith.constant dense<0.000000e+00> : vector<8x384xf32>
    %227 = tpu.matmul %221, %93, %cst_71 {dimension_numbers = #tpu.dot_dimension_numbers<[1], [0], [0], [1], [0, 0, 1, 1], [], []>} : vector<8x128xf32>, vector<128x384xf32>, vector<8x384xf32> -> vector<8x384xf32>
    %228 = vector.extract_strided_slice %226 {offsets = [0, 0], sizes = [8, 128], strides = [1, 1]} : vector<8x384xf32> to vector<8x128xf32>
    %229 = vector.extract_strided_slice %227 {offsets = [0, 0], sizes = [8, 128], strides = [1, 1]} : vector<8x384xf32> to vector<8x128xf32>
    %230 = arith.addf %228, %229 : vector<8x128xf32>
    %231 = arith.negf %230 : vector<8x128xf32>
    %232 = math.exp %231 : vector<8x128xf32>
    %cst_72 = arith.constant 1.000000e+00 : f32
    %233 = vector.broadcast %cst_72 : f32 to vector<8x128xf32>
    %234 = arith.addf %233, %232 : vector<8x128xf32>
    %235 = arith.divf %233, %234 : vector<8x128xf32>
    %236 = vector.extract_strided_slice %226 {offsets = [0, 128], sizes = [8, 128], strides = [1, 1]} : vector<8x384xf32> to vector<8x128xf32>
    %237 = vector.extract_strided_slice %227 {offsets = [0, 128], sizes = [8, 128], strides = [1, 1]} : vector<8x384xf32> to vector<8x128xf32>
    %238 = arith.addf %236, %237 : vector<8x128xf32>
    %239 = arith.negf %238 : vector<8x128xf32>
    %240 = math.exp %239 : vector<8x128xf32>
    %cst_73 = arith.constant 1.000000e+00 : f32
    %241 = vector.broadcast %cst_73 : f32 to vector<8x128xf32>
    %242 = arith.addf %241, %240 : vector<8x128xf32>
    %243 = arith.divf %241, %242 : vector<8x128xf32>
    %244 = vector.extract_strided_slice %226 {offsets = [0, 256], sizes = [8, 128], strides = [1, 1]} : vector<8x384xf32> to vector<8x128xf32>
    %245 = vector.extract_strided_slice %227 {offsets = [0, 256], sizes = [8, 128], strides = [1, 1]} : vector<8x384xf32> to vector<8x128xf32>
    %246 = vector.broadcast %94 : vector<1x128xf32> to vector<8x128xf32>
    %247 = arith.addf %245, %246 : vector<8x128xf32>
    %248 = arith.mulf %235, %247 : vector<8x128xf32>
    %249 = arith.addf %244, %248 : vector<8x128xf32>
    %250 = math.tanh %249 : vector<8x128xf32>
    %cst_74 = arith.constant 1.000000e+00 : f32
    %251 = vector.broadcast %cst_74 : f32 to vector<8x128xf32>
    %252 = arith.subf %251, %243 : vector<8x128xf32>
    %253 = arith.mulf %252, %250 : vector<8x128xf32>
    %254 = arith.mulf %243, %221 : vector<8x128xf32>
    %255 = arith.addf %253, %254 : vector<8x128xf32>
    %c3_i32 = arith.constant 3 : i32
    %c4_i32 = arith.constant 4 : i32
    %256 = vector.broadcast %c3_i32 : i32 to vector<1x128xi32>
    %257 = vector.broadcast %c4_i32 : i32 to vector<1x128xi32>
    %258 = arith.select %91, %256, %257 : vector<1x128xi1>, vector<1x128xi32>
    %259 = vector.broadcast %258 : vector<1x128xi32> to vector<8x128xi32>
    %260 = vector.broadcast %92 : vector<8x1xi32> to vector<8x128xi32>
    %261 = arith.cmpi slt, %259, %260 : vector<8x128xi32>
    %cst_75 = arith.constant 0.000000e+00 : f32
    %262 = vector.broadcast %cst_75 : f32 to vector<8x128xf32>
    %263 = arith.select %261, %255, %262 : vector<8x128xi1>, vector<8x128xf32>
    %264 = arith.select %261, %255, %221 : vector<8x128xi1>, vector<8x128xf32>
    %c3_76 = arith.constant 3 : index
    %c0_77 = arith.constant 0 : index
    %c0_78 = arith.constant 0 : index
    %265 = vector.load %arg6[%c3_76, %c0_77, %c0_78] : memref<8x8x128xf32, #tpu.memory_space<vmem>>, vector<1x8x128xf32>
    %266 = vector.shape_cast %265 : vector<1x8x128xf32> to vector<8x128xf32>
    %267 = vector.shape_cast %263 : vector<8x128xf32> to vector<1x8x128xf32>
    tpu.vector_store %arg6[%c3_76, %c0_77, %c0_78], %267 {strides = array<i32>} : memref<8x8x128xf32, #tpu.memory_space<vmem>>, vector<1x8x128xf32>,
    %c4_79 = arith.constant 4 : index
    %c0_80 = arith.constant 0 : index
    %c0_81 = arith.constant 0 : index
    %268 = vector.load %arg7[%c4_79, %c0_80, %c0_81] : memref<8x8x384xf32, #tpu.memory_space<vmem>>, vector<1x8x384xf32>
    %269 = vector.shape_cast %268 : vector<1x8x384xf32> to vector<8x384xf32>
    %cst_82 = arith.constant dense<0.000000e+00> : vector<8x384xf32>
    %270 = tpu.matmul %264, %93, %cst_82 {dimension_numbers = #tpu.dot_dimension_numbers<[1], [0], [0], [1], [0, 0, 1, 1], [], []>} : vector<8x128xf32>, vector<128x384xf32>, vector<8x384xf32> -> vector<8x384xf32>
    %271 = vector.extract_strided_slice %269 {offsets = [0, 0], sizes = [8, 128], strides = [1, 1]} : vector<8x384xf32> to vector<8x128xf32>
    %272 = vector.extract_strided_slice %270 {offsets = [0, 0], sizes = [8, 128], strides = [1, 1]} : vector<8x384xf32> to vector<8x128xf32>
    %273 = arith.addf %271, %272 : vector<8x128xf32>
    %274 = arith.negf %273 : vector<8x128xf32>
    %275 = math.exp %274 : vector<8x128xf32>
    %cst_83 = arith.constant 1.000000e+00 : f32
    %276 = vector.broadcast %cst_83 : f32 to vector<8x128xf32>
    %277 = arith.addf %276, %275 : vector<8x128xf32>
    %278 = arith.divf %276, %277 : vector<8x128xf32>
    %279 = vector.extract_strided_slice %269 {offsets = [0, 128], sizes = [8, 128], strides = [1, 1]} : vector<8x384xf32> to vector<8x128xf32>
    %280 = vector.extract_strided_slice %270 {offsets = [0, 128], sizes = [8, 128], strides = [1, 1]} : vector<8x384xf32> to vector<8x128xf32>
    %281 = arith.addf %279, %280 : vector<8x128xf32>
    %282 = arith.negf %281 : vector<8x128xf32>
    %283 = math.exp %282 : vector<8x128xf32>
    %cst_84 = arith.constant 1.000000e+00 : f32
    %284 = vector.broadcast %cst_84 : f32 to vector<8x128xf32>
    %285 = arith.addf %284, %283 : vector<8x128xf32>
    %286 = arith.divf %284, %285 : vector<8x128xf32>
    %287 = vector.extract_strided_slice %269 {offsets = [0, 256], sizes = [8, 128], strides = [1, 1]} : vector<8x384xf32> to vector<8x128xf32>
    %288 = vector.extract_strided_slice %270 {offsets = [0, 256], sizes = [8, 128], strides = [1, 1]} : vector<8x384xf32> to vector<8x128xf32>
    %289 = vector.broadcast %94 : vector<1x128xf32> to vector<8x128xf32>
    %290 = arith.addf %288, %289 : vector<8x128xf32>
    %291 = arith.mulf %278, %290 : vector<8x128xf32>
    %292 = arith.addf %287, %291 : vector<8x128xf32>
    %293 = math.tanh %292 : vector<8x128xf32>
    %cst_85 = arith.constant 1.000000e+00 : f32
    %294 = vector.broadcast %cst_85 : f32 to vector<8x128xf32>
    %295 = arith.subf %294, %286 : vector<8x128xf32>
    %296 = arith.mulf %295, %293 : vector<8x128xf32>
    %297 = arith.mulf %286, %264 : vector<8x128xf32>
    %298 = arith.addf %296, %297 : vector<8x128xf32>
    %c4_i32_86 = arith.constant 4 : i32
    %c3_i32_87 = arith.constant 3 : i32
    %299 = vector.broadcast %c4_i32_86 : i32 to vector<1x128xi32>
    %300 = vector.broadcast %c3_i32_87 : i32 to vector<1x128xi32>
    %301 = arith.select %91, %299, %300 : vector<1x128xi1>, vector<1x128xi32>
    %302 = vector.broadcast %301 : vector<1x128xi32> to vector<8x128xi32>
    %303 = vector.broadcast %92 : vector<8x1xi32> to vector<8x128xi32>
    %304 = arith.cmpi slt, %302, %303 : vector<8x128xi32>
    %cst_88 = arith.constant 0.000000e+00 : f32
    %305 = vector.broadcast %cst_88 : f32 to vector<8x128xf32>
    %306 = arith.select %304, %298, %305 : vector<8x128xi1>, vector<8x128xf32>
    %307 = arith.select %304, %298, %264 : vector<8x128xi1>, vector<8x128xf32>
    %c4_89 = arith.constant 4 : index
    %c0_90 = arith.constant 0 : index
    %c0_91 = arith.constant 0 : index
    %308 = vector.load %arg6[%c4_89, %c0_90, %c0_91] : memref<8x8x128xf32, #tpu.memory_space<vmem>>, vector<1x8x128xf32>
    %309 = vector.shape_cast %308 : vector<1x8x128xf32> to vector<8x128xf32>
    %310 = vector.shape_cast %306 : vector<8x128xf32> to vector<1x8x128xf32>
    tpu.vector_store %arg6[%c4_89, %c0_90, %c0_91], %310 {strides = array<i32>} : memref<8x8x128xf32, #tpu.memory_space<vmem>>, vector<1x8x128xf32>,
    %c5_92 = arith.constant 5 : index
    %c0_93 = arith.constant 0 : index
    %c0_94 = arith.constant 0 : index
    %311 = vector.load %arg7[%c5_92, %c0_93, %c0_94] : memref<8x8x384xf32, #tpu.memory_space<vmem>>, vector<1x8x384xf32>
    %312 = vector.shape_cast %311 : vector<1x8x384xf32> to vector<8x384xf32>
    %cst_95 = arith.constant dense<0.000000e+00> : vector<8x384xf32>
    %313 = tpu.matmul %307, %93, %cst_95 {dimension_numbers = #tpu.dot_dimension_numbers<[1], [0], [0], [1], [0, 0, 1, 1], [], []>} : vector<8x128xf32>, vector<128x384xf32>, vector<8x384xf32> -> vector<8x384xf32>
    %314 = vector.extract_strided_slice %312 {offsets = [0, 0], sizes = [8, 128], strides = [1, 1]} : vector<8x384xf32> to vector<8x128xf32>
    %315 = vector.extract_strided_slice %313 {offsets = [0, 0], sizes = [8, 128], strides = [1, 1]} : vector<8x384xf32> to vector<8x128xf32>
    %316 = arith.addf %314, %315 : vector<8x128xf32>
    %317 = arith.negf %316 : vector<8x128xf32>
    %318 = math.exp %317 : vector<8x128xf32>
    %cst_96 = arith.constant 1.000000e+00 : f32
    %319 = vector.broadcast %cst_96 : f32 to vector<8x128xf32>
    %320 = arith.addf %319, %318 : vector<8x128xf32>
    %321 = arith.divf %319, %320 : vector<8x128xf32>
    %322 = vector.extract_strided_slice %312 {offsets = [0, 128], sizes = [8, 128], strides = [1, 1]} : vector<8x384xf32> to vector<8x128xf32>
    %323 = vector.extract_strided_slice %313 {offsets = [0, 128], sizes = [8, 128], strides = [1, 1]} : vector<8x384xf32> to vector<8x128xf32>
    %324 = arith.addf %322, %323 : vector<8x128xf32>
    %325 = arith.negf %324 : vector<8x128xf32>
    %326 = math.exp %325 : vector<8x128xf32>
    %cst_97 = arith.constant 1.000000e+00 : f32
    %327 = vector.broadcast %cst_97 : f32 to vector<8x128xf32>
    %328 = arith.addf %327, %326 : vector<8x128xf32>
    %329 = arith.divf %327, %328 : vector<8x128xf32>
    %330 = vector.extract_strided_slice %312 {offsets = [0, 256], sizes = [8, 128], strides = [1, 1]} : vector<8x384xf32> to vector<8x128xf32>
    %331 = vector.extract_strided_slice %313 {offsets = [0, 256], sizes = [8, 128], strides = [1, 1]} : vector<8x384xf32> to vector<8x128xf32>
    %332 = vector.broadcast %94 : vector<1x128xf32> to vector<8x128xf32>
    %333 = arith.addf %331, %332 : vector<8x128xf32>
    %334 = arith.mulf %321, %333 : vector<8x128xf32>
    %335 = arith.addf %330, %334 : vector<8x128xf32>
    %336 = math.tanh %335 : vector<8x128xf32>
    %cst_98 = arith.constant 1.000000e+00 : f32
    %337 = vector.broadcast %cst_98 : f32 to vector<8x128xf32>
    %338 = arith.subf %337, %329 : vector<8x128xf32>
    %339 = arith.mulf %338, %336 : vector<8x128xf32>
    %340 = arith.mulf %329, %307 : vector<8x128xf32>
    %341 = arith.addf %339, %340 : vector<8x128xf32>
    %c5_i32_99 = arith.constant 5 : i32
    %c2_i32_100 = arith.constant 2 : i32
    %342 = vector.broadcast %c5_i32_99 : i32 to vector<1x128xi32>
    %343 = vector.broadcast %c2_i32_100 : i32 to vector<1x128xi32>
    %344 = arith.select %91, %342, %343 : vector<1x128xi1>, vector<1x128xi32>
    %345 = vector.broadcast %344 : vector<1x128xi32> to vector<8x128xi32>
    %346 = vector.broadcast %92 : vector<8x1xi32> to vector<8x128xi32>
    %347 = arith.cmpi slt, %345, %346 : vector<8x128xi32>
    %cst_101 = arith.constant 0.000000e+00 : f32
    %348 = vector.broadcast %cst_101 : f32 to vector<8x128xf32>
    %349 = arith.select %347, %341, %348 : vector<8x128xi1>, vector<8x128xf32>
    %350 = arith.select %347, %341, %307 : vector<8x128xi1>, vector<8x128xf32>
    %c5_102 = arith.constant 5 : index
    %c0_103 = arith.constant 0 : index
    %c0_104 = arith.constant 0 : index
    %351 = vector.load %arg6[%c5_102, %c0_103, %c0_104] : memref<8x8x128xf32, #tpu.memory_space<vmem>>, vector<1x8x128xf32>
    %352 = vector.shape_cast %351 : vector<1x8x128xf32> to vector<8x128xf32>
    %353 = vector.shape_cast %349 : vector<8x128xf32> to vector<1x8x128xf32>
    tpu.vector_store %arg6[%c5_102, %c0_103, %c0_104], %353 {strides = array<i32>} : memref<8x8x128xf32, #tpu.memory_space<vmem>>, vector<1x8x128xf32>,
    %c6_105 = arith.constant 6 : index
    %c0_106 = arith.constant 0 : index
    %c0_107 = arith.constant 0 : index
    %354 = vector.load %arg7[%c6_105, %c0_106, %c0_107] : memref<8x8x384xf32, #tpu.memory_space<vmem>>, vector<1x8x384xf32>
    %355 = vector.shape_cast %354 : vector<1x8x384xf32> to vector<8x384xf32>
    %cst_108 = arith.constant dense<0.000000e+00> : vector<8x384xf32>
    %356 = tpu.matmul %350, %93, %cst_108 {dimension_numbers = #tpu.dot_dimension_numbers<[1], [0], [0], [1], [0, 0, 1, 1], [], []>} : vector<8x128xf32>, vector<128x384xf32>, vector<8x384xf32> -> vector<8x384xf32>
    %357 = vector.extract_strided_slice %355 {offsets = [0, 0], sizes = [8, 128], strides = [1, 1]} : vector<8x384xf32> to vector<8x128xf32>
    %358 = vector.extract_strided_slice %356 {offsets = [0, 0], sizes = [8, 128], strides = [1, 1]} : vector<8x384xf32> to vector<8x128xf32>
    %359 = arith.addf %357, %358 : vector<8x128xf32>
    %360 = arith.negf %359 : vector<8x128xf32>
    %361 = math.exp %360 : vector<8x128xf32>
    %cst_109 = arith.constant 1.000000e+00 : f32
    %362 = vector.broadcast %cst_109 : f32 to vector<8x128xf32>
    %363 = arith.addf %362, %361 : vector<8x128xf32>
    %364 = arith.divf %362, %363 : vector<8x128xf32>
    %365 = vector.extract_strided_slice %355 {offsets = [0, 128], sizes = [8, 128], strides = [1, 1]} : vector<8x384xf32> to vector<8x128xf32>
    %366 = vector.extract_strided_slice %356 {offsets = [0, 128], sizes = [8, 128], strides = [1, 1]} : vector<8x384xf32> to vector<8x128xf32>
    %367 = arith.addf %365, %366 : vector<8x128xf32>
    %368 = arith.negf %367 : vector<8x128xf32>
    %369 = math.exp %368 : vector<8x128xf32>
    %cst_110 = arith.constant 1.000000e+00 : f32
    %370 = vector.broadcast %cst_110 : f32 to vector<8x128xf32>
    %371 = arith.addf %370, %369 : vector<8x128xf32>
    %372 = arith.divf %370, %371 : vector<8x128xf32>
    %373 = vector.extract_strided_slice %355 {offsets = [0, 256], sizes = [8, 128], strides = [1, 1]} : vector<8x384xf32> to vector<8x128xf32>
    %374 = vector.extract_strided_slice %356 {offsets = [0, 256], sizes = [8, 128], strides = [1, 1]} : vector<8x384xf32> to vector<8x128xf32>
    %375 = vector.broadcast %94 : vector<1x128xf32> to vector<8x128xf32>
    %376 = arith.addf %374, %375 : vector<8x128xf32>
    %377 = arith.mulf %364, %376 : vector<8x128xf32>
    %378 = arith.addf %373, %377 : vector<8x128xf32>
    %379 = math.tanh %378 : vector<8x128xf32>
    %cst_111 = arith.constant 1.000000e+00 : f32
    %380 = vector.broadcast %cst_111 : f32 to vector<8x128xf32>
    %381 = arith.subf %380, %372 : vector<8x128xf32>
    %382 = arith.mulf %381, %379 : vector<8x128xf32>
    %383 = arith.mulf %372, %350 : vector<8x128xf32>
    %384 = arith.addf %382, %383 : vector<8x128xf32>
    %c6_i32_112 = arith.constant 6 : i32
    %c1_i32_113 = arith.constant 1 : i32
    %385 = vector.broadcast %c6_i32_112 : i32 to vector<1x128xi32>
    %386 = vector.broadcast %c1_i32_113 : i32 to vector<1x128xi32>
    %387 = arith.select %91, %385, %386 : vector<1x128xi1>, vector<1x128xi32>
    %388 = vector.broadcast %387 : vector<1x128xi32> to vector<8x128xi32>
    %389 = vector.broadcast %92 : vector<8x1xi32> to vector<8x128xi32>
    %390 = arith.cmpi slt, %388, %389 : vector<8x128xi32>
    %cst_114 = arith.constant 0.000000e+00 : f32
    %391 = vector.broadcast %cst_114 : f32 to vector<8x128xf32>
    %392 = arith.select %390, %384, %391 : vector<8x128xi1>, vector<8x128xf32>
    %393 = arith.select %390, %384, %350 : vector<8x128xi1>, vector<8x128xf32>
    %c6_115 = arith.constant 6 : index
    %c0_116 = arith.constant 0 : index
    %c0_117 = arith.constant 0 : index
    %394 = vector.load %arg6[%c6_115, %c0_116, %c0_117] : memref<8x8x128xf32, #tpu.memory_space<vmem>>, vector<1x8x128xf32>
    %395 = vector.shape_cast %394 : vector<1x8x128xf32> to vector<8x128xf32>
    %396 = vector.shape_cast %392 : vector<8x128xf32> to vector<1x8x128xf32>
    tpu.vector_store %arg6[%c6_115, %c0_116, %c0_117], %396 {strides = array<i32>} : memref<8x8x128xf32, #tpu.memory_space<vmem>>, vector<1x8x128xf32>,
    %c7_118 = arith.constant 7 : index
    %c0_119 = arith.constant 0 : index
    %c0_120 = arith.constant 0 : index
    %397 = vector.load %arg7[%c7_118, %c0_119, %c0_120] : memref<8x8x384xf32, #tpu.memory_space<vmem>>, vector<1x8x384xf32>
    %398 = vector.shape_cast %397 : vector<1x8x384xf32> to vector<8x384xf32>
    %cst_121 = arith.constant dense<0.000000e+00> : vector<8x384xf32>
    %399 = tpu.matmul %393, %93, %cst_121 {dimension_numbers = #tpu.dot_dimension_numbers<[1], [0], [0], [1], [0, 0, 1, 1], [], []>} : vector<8x128xf32>, vector<128x384xf32>, vector<8x384xf32> -> vector<8x384xf32>
    %400 = vector.extract_strided_slice %398 {offsets = [0, 0], sizes = [8, 128], strides = [1, 1]} : vector<8x384xf32> to vector<8x128xf32>
    %401 = vector.extract_strided_slice %399 {offsets = [0, 0], sizes = [8, 128], strides = [1, 1]} : vector<8x384xf32> to vector<8x128xf32>
    %402 = arith.addf %400, %401 : vector<8x128xf32>
    %403 = arith.negf %402 : vector<8x128xf32>
    %404 = math.exp %403 : vector<8x128xf32>
    %cst_122 = arith.constant 1.000000e+00 : f32
    %405 = vector.broadcast %cst_122 : f32 to vector<8x128xf32>
    %406 = arith.addf %405, %404 : vector<8x128xf32>
    %407 = arith.divf %405, %406 : vector<8x128xf32>
    %408 = vector.extract_strided_slice %398 {offsets = [0, 128], sizes = [8, 128], strides = [1, 1]} : vector<8x384xf32> to vector<8x128xf32>
    %409 = vector.extract_strided_slice %399 {offsets = [0, 128], sizes = [8, 128], strides = [1, 1]} : vector<8x384xf32> to vector<8x128xf32>
    %410 = arith.addf %408, %409 : vector<8x128xf32>
    %411 = arith.negf %410 : vector<8x128xf32>
    %412 = math.exp %411 : vector<8x128xf32>
    %cst_123 = arith.constant 1.000000e+00 : f32
    %413 = vector.broadcast %cst_123 : f32 to vector<8x128xf32>
    %414 = arith.addf %413, %412 : vector<8x128xf32>
    %415 = arith.divf %413, %414 : vector<8x128xf32>
    %416 = vector.extract_strided_slice %398 {offsets = [0, 256], sizes = [8, 128], strides = [1, 1]} : vector<8x384xf32> to vector<8x128xf32>
    %417 = vector.extract_strided_slice %399 {offsets = [0, 256], sizes = [8, 128], strides = [1, 1]} : vector<8x384xf32> to vector<8x128xf32>
    %418 = vector.broadcast %94 : vector<1x128xf32> to vector<8x128xf32>
    %419 = arith.addf %417, %418 : vector<8x128xf32>
    %420 = arith.mulf %407, %419 : vector<8x128xf32>
    %421 = arith.addf %416, %420 : vector<8x128xf32>
    %422 = math.tanh %421 : vector<8x128xf32>
    %cst_124 = arith.constant 1.000000e+00 : f32
    %423 = vector.broadcast %cst_124 : f32 to vector<8x128xf32>
    %424 = arith.subf %423, %415 : vector<8x128xf32>
    %425 = arith.mulf %424, %422 : vector<8x128xf32>
    %426 = arith.mulf %415, %393 : vector<8x128xf32>
    %427 = arith.addf %425, %426 : vector<8x128xf32>
    %c7_i32_125 = arith.constant 7 : i32
    %c0_i32_126 = arith.constant 0 : i32
    %428 = vector.broadcast %c7_i32_125 : i32 to vector<1x128xi32>
    %429 = vector.broadcast %c0_i32_126 : i32 to vector<1x128xi32>
    %430 = arith.select %91, %428, %429 : vector<1x128xi1>, vector<1x128xi32>
    %431 = vector.broadcast %430 : vector<1x128xi32> to vector<8x128xi32>
    %432 = vector.broadcast %92 : vector<8x1xi32> to vector<8x128xi32>
    %433 = arith.cmpi slt, %431, %432 : vector<8x128xi32>
    %cst_127 = arith.constant 0.000000e+00 : f32
    %434 = vector.broadcast %cst_127 : f32 to vector<8x128xf32>
    %435 = arith.select %433, %427, %434 : vector<8x128xi1>, vector<8x128xf32>
    %c7_128 = arith.constant 7 : index
    %c0_129 = arith.constant 0 : index
    %c0_130 = arith.constant 0 : index
    %436 = vector.load %arg6[%c7_128, %c0_129, %c0_130] : memref<8x8x128xf32, #tpu.memory_space<vmem>>, vector<1x8x128xf32>
    %437 = vector.shape_cast %436 : vector<1x8x128xf32> to vector<8x128xf32>
    %438 = vector.shape_cast %435 : vector<8x128xf32> to vector<1x8x128xf32>
    tpu.vector_store %arg6[%c7_128, %c0_129, %c0_130], %438 {strides = array<i32>} : memref<8x8x128xf32, #tpu.memory_space<vmem>>, vector<1x8x128xf32>,
    return
  }
}

</mosaic_0001>

<llo_original>
// kernel: tpu_custom_call.1
$region0: #{tpu_custom_call.1}
  #allocation0 [shape = 'u32[]', space=smem, size = 0x4, offset = 0x4, fixed_abs, tag = 'smem constant byte address 0x4 - core index']
  #allocation1 [shape = 'u32[144,128]{1,0:T(1,128)}', space=vmem, size = 0x12000, scoped, tag = 'internal scratch']
  #allocation2 [shape = 'f32[8,8,384]{2,1,0:T(8,128)}', space=vmem, size = 0x18000, scoped, tag = 'scratch operand']
  %s0 = inlined_call_operand.hbm [shape: f32[64,128], index: 0, kind: input, shape index: {}]
  %s1 = inlined_call_operand.hbm [shape: f32[128,384], index: 1, kind: input, shape index: {}]
  %s2 = inlined_call_operand.vmem [shape: f32[1,384], index: 2, kind: input, shape index: {}]
  %s3 = inlined_call_operand.hbm [shape: f32[128,384], index: 3, kind: input, shape index: {}]
  %s4 = inlined_call_operand.vmem [shape: f32[1,128], index: 4, kind: input, shape index: {}]
  %s5 = inlined_call_operand.vmem [shape: s32[8,1], index: 5, kind: input, shape index: {}]
  %s6 = inlined_call_operand.hbm [shape: f32[8,8,128], index: 6, kind: output, shape index: {}]
  %s7 = sld [smem:[#allocation0]]
  $region46: #{tpu_custom_call.1} parent=0
    _
  %s9 = ssub.s32 1, %s7
  %s10 = scalar_select 0, %s9, %s7
  $region1: #{tpu_custom_call.1} parent=0
    #allocation3 [shape = 'u8[32768]{0}', space=vmem, size = 0x8000, scoped, tag = 'input window, operand 0, single buffered']
    #allocation4 [shape = 's32[1]{0}', space=sflag, size = 0x4, scoped, tag = 'scoped memory for tpu_custom_call.1']
    #allocation5 [shape = 's32[1]{0}', space=sflag, size = 0x4, scoped, tag = 'scoped memory for tpu_custom_call.1']
    #allocation6 [shape = 'u8[196608]{0}', space=vmem, size = 0x30000, scoped, tag = 'input window, operand 1, single buffered']
    #allocation7 [shape = 's32[1]{0}', space=sflag, size = 0x4, scoped, tag = 'scoped memory for tpu_custom_call.1']
    #allocation8 [shape = 'u8[196608]{0}', space=vmem, size = 0x30000, scoped, tag = 'input window, operand 3, single buffered']
    #allocation9 [shape = 'u8[32768]{0}', space=vmem, size = 0x8000, scoped, tag = 'output window, operand 0, single buffered']
    %11 = vsyncpa [#allocation4], 0
    %12 = vsyncpa [#allocation7], 0
    %13 = vsyncpa [#allocation5], 0
    // Predicated region
    $region2: #{tpu_custom_call.1} parent=1 // pred_check
      _
    $region3: #{tpu_custom_call.1} parent=1 // pred_check_branch
      %15 = sbr.rel (0) target = $region5
    $region4: #{tpu_custom_call.1} parent=1 // pred_region
      %s17 = ssub.s32 1024, 1024
      %18 = vsyncadd [#allocation4], %s17
      %s19 = sshll.u32 [#allocation3], 4
      %s20 = int_to_ptr.vmem [resolvable:$true] %s19
      %25 = dma.hbm_to_vmem [thread:$0]  %s0, 1024, %s20, [#allocation4], 128, 128, 8
    $region5: #{tpu_custom_call.1} parent=1 // pred_fallthru
      _
    // Predicated region
    $region6: #{tpu_custom_call.1} parent=1 // pred_check
      _
    $region7: #{tpu_custom_call.1} parent=1 // pred_check_branch
      %27 = sbr.rel (0) target = $region9
    $region8: #{tpu_custom_call.1} parent=1 // pred_region
      %s29 = ssub.s32 6144, 6144
      %30 = vsyncadd [#allocation7], %s29
      %s31 = sshll.u32 [#allocation6], 4
      %s32 = int_to_ptr.vmem [resolvable:$true] %s31
      %37 = dma.hbm_to_vmem [thread:$0]  %s1, 6144, %s32, [#allocation7], 384, 384, 24
    $region9: #{tpu_custom_call.1} parent=1 // pred_fallthru
      _
    // Predicated region
    $region10: #{tpu_custom_call.1} parent=1 // pred_check
      _
    $region11: #{tpu_custom_call.1} parent=1 // pred_check_branch
      %39 = sbr.rel (0) target = $region13
    $region12: #{tpu_custom_call.1} parent=1 // pred_region
      _
    $region13: #{tpu_custom_call.1} parent=1 // pred_fallthru
      _
    // Predicated region
    $region14: #{tpu_custom_call.1} parent=1 // pred_check
      _
    $region15: #{tpu_custom_call.1} parent=1 // pred_check_branch
      %41 = sbr.rel (0) target = $region17
    $region16: #{tpu_custom_call.1} parent=1 // pred_region
      %s43 = ssub.s32 6144, 6144
      %44 = vsyncadd [#allocation7], %s43
      %s45 = sshll.u32 [#allocation8], 4
      %s46 = int_to_ptr.vmem [resolvable:$true] %s45
      %51 = dma.hbm_to_vmem [thread:$0]  %s3, 6144, %s46, [#allocation7], 384, 384, 24
    $region17: #{tpu_custom_call.1} parent=1 // pred_fallthru
      _
    // Predicated region
    $region18: #{tpu_custom_call.1} parent=1 // pred_check
      _
    $region19: #{tpu_custom_call.1} parent=1 // pred_check_branch
      %53 = sbr.rel (0) target = $region21
    $region20: #{tpu_custom_call.1} parent=1 // pred_region
      _
    $region21: #{tpu_custom_call.1} parent=1 // pred_fallthru
      _
    // Predicated region
    $region22: #{tpu_custom_call.1} parent=1 // pred_check
      _
    $region23: #{tpu_custom_call.1} parent=1 // pred_check_branch
      %55 = sbr.rel (0) target = $region25
    $region24: #{tpu_custom_call.1} parent=1 // pred_region
      _
    $region25: #{tpu_custom_call.1} parent=1 // pred_fallthru
      _
    // Predicated region
    $region26: #{tpu_custom_call.1} parent=1 // pred_check
      _
    $region27: #{tpu_custom_call.1} parent=1 // pred_check_branch
      %57 = sbr.rel (0) target = $region29
    $region28: #{tpu_custom_call.1} parent=1 // pred_region
      %58 = dma.done [#allocation4], 1024
    $region29: #{tpu_custom_call.1} parent=1 // pred_fallthru
      _
    // Predicated region
    $region30: #{tpu_custom_call.1} parent=1 // pred_check
      _
    $region31: #{tpu_custom_call.1} parent=1 // pred_check_branch
      %60 = sbr.rel (0) target = $region33
    $region32: #{tpu_custom_call.1} parent=1 // pred_region
      %61 = dma.done [#allocation7], 6144
    $region33: #{tpu_custom_call.1} parent=1 // pred_fallthru
      _
    // Predicated region
    $region34: #{tpu_custom_call.1} parent=1 // pred_check
      _
    $region35: #{tpu_custom_call.1} parent=1 // pred_check_branch
      %63 = sbr.rel (0) target = $region37
    $region36: #{tpu_custom_call.1} parent=1 // pred_region
      %64 = dma.done [#allocation7], 6144
    $region37: #{tpu_custom_call.1} parent=1 // pred_fallthru
      _
    %v65 = vld [vmem:[#allocation3] sm:$0xff]
    %v66 = vld [vmem:[#allocation3 + $0x8] sm:$0xff]
    %v67 = vld [vmem:[#allocation3 + $0x10] sm:$0xff]
    %v68 = vld [vmem:[#allocation3 + $0x18] sm:$0xff]
    %v69 = vld [vmem:[#allocation3 + $0x20] sm:$0xff]
    %v70 = vld [vmem:[#allocation3 + $0x28] sm:$0xff]
    %v71 = vld [vmem:[#allocation3 + $0x30] sm:$0xff]
    %v72 = vld [vmem:[#allocation3 + $0x38] sm:$0xff]
    %v73 = vld [vmem:[#allocation6] sm:$0xff]
    %v74 = vld [vmem:[#allocation6 + $0x8] sm:$0xff]
    %v75 = vld [vmem:[#allocation6 + $0x10] sm:$0xff]
    %v76 = vld [vmem:[#allocation6 + $0x18] sm:$0xff]
    %v77 = vld [vmem:[#allocation6 + $0x20] sm:$0xff]
    %v78 = vld [vmem:[#allocation6 + $0x28] sm:$0xff]
    %v79 = vld [vmem:[#allocation6 + $0x30] sm:$0xff]
    %v80 = vld [vmem:[#allocation6 + $0x38] sm:$0xff]
    %v81 = vld [vmem:[#allocation6 + $0x40] sm:$0xff]
    %v82 = vld [vmem:[#allocation6 + $0x48] sm:$0xff]
    %v83 = vld [vmem:[#allocation6 + $0x50] sm:$0xff]
    %v84 = vld [vmem:[#allocation6 + $0x58] sm:$0xff]
    %v85 = vld [vmem:[#allocation6 + $0x60] sm:$0xff]
    %v86 = vld [vmem:[#allocation6 + $0x68] sm:$0xff]
    %v87 = vld [vmem:[#allocation6 + $0x70] sm:$0xff]
    %v88 = vld [vmem:[#allocation6 + $0x78] sm:$0xff]
    %v89 = vld [vmem:[#allocation6 + $0x80] sm:$0xff]
    %v90 = vld [vmem:[#allocation6 + $0x88] sm:$0xff]
    %v91 = vld [vmem:[#allocation6 + $0x90] sm:$0xff]
    %v92 = vld [vmem:[#allocation6 + $0x98] sm:$0xff]
    %v93 = vld [vmem:[#allocation6 + $0xa0] sm:$0xff]
    %v94 = vld [vmem:[#allocation6 + $0xa8] sm:$0xff]
    %v95 = vld [vmem:[#allocation6 + $0xb0] sm:$0xff]
    %v96 = vld [vmem:[#allocation6 + $0xb8] sm:$0xff]
    %v97 = vld [vmem:[#allocation6 + $0xc0] sm:$0xff]
    %v98 = vld [vmem:[#allocation6 + $0xc8] sm:$0xff]
    %v99 = vld [vmem:[#allocation6 + $0xd0] sm:$0xff]
    %v100 = vld [vmem:[#allocation6 + $0xd8] sm:$0xff]
    %v101 = vld [vmem:[#allocation6 + $0xe0] sm:$0xff]
    %v102 = vld [vmem:[#allocation6 + $0xe8] sm:$0xff]
    %v103 = vld [vmem:[#allocation6 + $0xf0] sm:$0xff]
    %v104 = vld [vmem:[#allocation6 + $0xf8] sm:$0xff]
    %v105 = vld [vmem:[#allocation6 + $0x100] sm:$0xff]
    %v106 = vld [vmem:[#allocation6 + $0x108] sm:$0xff]
    %v107 = vld [vmem:[#allocation6 + $0x110] sm:$0xff]
    %v108 = vld [vmem:[#allocation6 + $0x118] sm:$0xff]
    %v109 = vld [vmem:[#allocation6 + $0x120] sm:$0xff]
    %v110 = vld [vmem:[#allocation6 + $0x128] sm:$0xff]
    %v111 = vld [vmem:[#allocation6 + $0x130] sm:$0xff]
    %v112 = vld [vmem:[#allocation6 + $0x138] sm:$0xff]
    %v113 = vld [vmem:[#allocation6 + $0x140] sm:$0xff]
    %v114 = vld [vmem:[#allocation6 + $0x148] sm:$0xff]
    %v115 = vld [vmem:[#allocation6 + $0x150] sm:$0xff]
    %v116 = vld [vmem:[#allocation6 + $0x158] sm:$0xff]
    %v117 = vld [vmem:[#allocation6 + $0x160] sm:$0xff]
    %v118 = vld [vmem:[#allocation6 + $0x168] sm:$0xff]
    %v119 = vld [vmem:[#allocation6 + $0x170] sm:$0xff]
    %v120 = vld [vmem:[#allocation6 + $0x178] sm:$0xff]
    %v121 = vld [vmem:[%s2] sm:$0x7]
    %v123 = vlaneseq
    %v124 = vshrl.u32 %v123, 7
    %v125 = vsub.s32 0, %v124
    %v126 = vrot.slane %v121, %v125
    %v127 = vlaneseq
    %v128 = vshrl.u32 %v127, 7
    %v129 = vsub.s32 1, %v128
    %v130 = vrot.slane %v121, %v129
    %v131 = vlaneseq
    %v132 = vshrl.u32 %v131, 7
    %v133 = vsub.s32 2, %v132
    %v134 = vrot.slane %v121, %v133
    %138 = vmatprep.subr.mxu0 %v74
    %139 = vmatpush1.msra.mxu0 %v73
    %140 = vmatprep.subr.mxu0 %v77
    %141 = vmatpush1.msra.mxu0 %v76
    %142 = vmatprep.subr.mxu0 %v80
    %143 = vmatpush1.msra.mxu0 %v79
    %144 = vmatprep.subr.mxu0 %v83
    %145 = vmatpush1.msra.mxu0 %v82
    %146 = vmatprep.subr.mxu0 %v86
    %147 = vmatpush1.msra.mxu0 %v85
    %148 = vmatprep.subr.mxu0 %v89
    %149 = vmatpush1.msra.mxu0 %v88
    %150 = vmatprep.subr.mxu0 %v92
    %151 = vmatpush1.msra.mxu0 %v91
    %152 = vmatprep.subr.mxu0 %v95
    %153 = vmatpush1.msra.mxu0 %v94
    %154 = vmatprep.subr.mxu0 %v98
    %155 = vmatpush1.msra.mxu0 %v97
    %156 = vmatprep.subr.mxu0 %v101
    %157 = vmatpush1.msra.mxu0 %v100
    %158 = vmatprep.subr.mxu0 %v104
    %159 = vmatpush1.msra.mxu0 %v103
    %160 = vmatprep.subr.mxu0 %v107
    %161 = vmatpush1.msra.mxu0 %v106
    %162 = vmatprep.subr.mxu0 %v110
    %163 = vmatpush1.msra.mxu0 %v109
    %164 = vmatprep.subr.mxu0 %v113
    %165 = vmatpush1.msra.mxu0 %v112
    %166 = vmatprep.subr.mxu0 %v116
    %167 = vmatpush1.msra.mxu0 %v115
    %168 = vmatprep.subr.mxu0 %v119
    %169 = vmatpush1.msra.mxu0 %v118
    %170 = vmatprep.subr.mxu0 0.0
    %171 = vmatpush1.msra.mxu0 0.0
    %172 = vmatprep.subr.mxu0 0.0
    %173 = vmatpush1.msra.mxu0 0.0
    %174 = vmatprep.subr.mxu0 0.0
    %175 = vmatpush1.msra.mxu0 0.0
    %176 = vmatprep.subr.mxu0 0.0
    %177 = vmatpush1.msra.mxu0 0.0
    %178 = vmatprep.subr.mxu0 0.0
    %179 = vmatpush1.msra.mxu0 0.0
    %180 = vmatprep.subr.mxu0 0.0
    %181 = vmatpush1.msra.mxu0 0.0
    %182 = vmatprep.subr.mxu0 0.0
    %183 = vmatpush1.msra.mxu0 0.0
    %184 = vmatprep.subr.mxu0 0.0
    %185 = vmatpush1.msra.mxu0 0.0
    %186 = vmatprep.subr.mxu0 0.0
    %187 = vmatpush1.msra.mxu0 0.0
    %188 = vmatprep.subr.mxu0 0.0
    %189 = vmatpush1.msra.mxu0 0.0
    %190 = vmatprep.subr.mxu0 0.0
    %191 = vmatpush1.msra.mxu0 0.0
    %192 = vmatprep.subr.mxu0 0.0
    %193 = vmatpush1.msra.mxu0 0.0
    %194 = vmatprep.subr.mxu0 0.0
    %195 = vmatpush1.msra.mxu0 0.0
    %196 = vmatprep.subr.mxu0 0.0
    %197 = vmatpush1.msra.mxu0 0.0
    %198 = vmatprep.subr.mxu0 0.0
    %199 = vmatpush1.msra.mxu0 0.0
    %200 = vmatprep.subr.mxu0 0.0
    %201 = vmatpush1.msra.mxu0 0.0
    %202 = vmatprep.mubr.f32.mxu0 0.0
    %203 = vmatmul.mubr.f32.gmra.mrb[0].mxu0 %v65
    %v204 = vpop.f32.mrb[0].mxu0
    %v205 = vadd.f32 %v126, %v204
    %v206 = vpop.f32.mrb[0].mxu0
    %v207 = vadd.f32 %v130, %v206
    %208 = vmatprep.mubr.f32.mxu0 0.0
    %209 = vmatmul.mubr.f32.gmra.mrb[0].mxu0 %v66
    %v210 = vpop.f32.mrb[0].mxu0
    %v211 = vadd.f32 %v126, %v210
    %v212 = vpop.f32.mrb[0].mxu0
    %v213 = vadd.f32 %v130, %v212
    %214 = vmatprep.mubr.f32.mxu0 0.0
    %215 = vmatmul.mubr.f32.gmra.mrb[0].mxu0 %v67
    %v216 = vpop.f32.mrb[0].mxu0
    %v217 = vadd.f32 %v126, %v216
    %v218 = vpop.f32.mrb[0].mxu0
    %v219 = vadd.f32 %v130, %v218
    %220 = vmatprep.mubr.f32.mxu0 0.0
    %221 = vmatmul.mubr.f32.gmra.mrb[0].mxu0 %v68
    %v222 = vpop.f32.mrb[0].mxu0
    %v223 = vadd.f32 %v126, %v222
    %v224 = vpop.f32.mrb[0].mxu0
    %v225 = vadd.f32 %v130, %v224
    %226 = vmatprep.mubr.f32.mxu0 0.0
    %227 = vmatmul.mubr.f32.gmra.mrb[0].mxu0 %v69
    %v228 = vpop.f32.mrb[0].mxu0
    %v229 = vadd.f32 %v126, %v228
    %v230 = vpop.f32.mrb[0].mxu0
    %v231 = vadd.f32 %v130, %v230
    %232 = vmatprep.mubr.f32.mxu0 0.0
    %233 = vmatmul.mubr.f32.gmra.mrb[0].mxu0 %v70
    %v234 = vpop.f32.mrb[0].mxu0
    %v235 = vadd.f32 %v126, %v234
    %v236 = vpop.f32.mrb[0].mxu0
    %v237 = vadd.f32 %v130, %v236
    %238 = vmatprep.mubr.f32.mxu0 0.0
    %239 = vmatmul.mubr.f32.gmra.mrb[0].mxu0 %v71
    %v240 = vpop.f32.mrb[0].mxu0
    %v241 = vadd.f32 %v126, %v240
    %v242 = vpop.f32.mrb[0].mxu0
    %v243 = vadd.f32 %v130, %v242
    %244 = vmatprep.mubr.f32.mxu0 0.0
    %245 = vmatmul.mubr.f32.gmra.mrb[0].mxu0 %v72
    %v246 = vpop.f32.mrb[0].mxu0
    %v247 = vadd.f32 %v126, %v246
    %v248 = vpop.f32.mrb[0].mxu0
    %v249 = vadd.f32 %v130, %v248
    %250 = vdwg.mxu0
    %251 = vmatprep.subr.mxu0 0.0
    %252 = vmatpush1.msra.mxu0 %v75
    %253 = vmatprep.subr.mxu0 0.0
    %254 = vmatpush1.msra.mxu0 %v78
    %255 = vmatprep.subr.mxu0 0.0
    %256 = vmatpush1.msra.mxu0 %v81
    %257 = vmatprep.subr.mxu0 0.0
    %258 = vmatpush1.msra.mxu0 %v84
    %259 = vmatprep.subr.mxu0 0.0
    %260 = vmatpush1.msra.mxu0 %v87
    %261 = vmatprep.subr.mxu0 0.0
    %262 = vmatpush1.msra.mxu0 %v90
    %263 = vmatprep.subr.mxu0 0.0
    %264 = vmatpush1.msra.mxu0 %v93
    %265 = vmatprep.subr.mxu0 0.0
    %266 = vmatpush1.msra.mxu0 %v96
    %267 = vmatprep.subr.mxu0 0.0
    %268 = vmatpush1.msra.mxu0 %v99
    %269 = vmatprep.subr.mxu0 0.0
    %270 = vmatpush1.msra.mxu0 %v102
    %271 = vmatprep.subr.mxu0 0.0
    %272 = vmatpush1.msra.mxu0 %v105
    %273 = vmatprep.subr.mxu0 0.0
    %274 = vmatpush1.msra.mxu0 %v108
    %275 = vmatprep.subr.mxu0 0.0
    %276 = vmatpush1.msra.mxu0 %v111
    %277 = vmatprep.subr.mxu0 0.0
    %278 = vmatpush1.msra.mxu0 %v114
    %279 = vmatprep.subr.mxu0 0.0
    %280 = vmatpush1.msra.mxu0 %v117
    %281 = vmatprep.subr.mxu0 0.0
    %282 = vmatpush1.msra.mxu0 %v120
    %283 = vmatprep.subr.mxu0 0.0
    %284 = vmatpush1.msra.mxu0 0.0
    %285 = vmatprep.subr.mxu0 0.0
    %286 = vmatpush1.msra.mxu0 0.0
    %287 = vmatprep.subr.mxu0 0.0
    %288 = vmatpush1.msra.mxu0 0.0
    %289 = vmatprep.subr.mxu0 0.0
    %290 = vmatpush1.msra.mxu0 0.0
    %291 = vmatprep.subr.mxu0 0.0
    %292 = vmatpush1.msra.mxu0 0.0
    %293 = vmatprep.subr.mxu0 0.0
    %294 = vmatpush1.msra.mxu0 0.0
    %295 = vmatprep.subr.mxu0 0.0
    %296 = vmatpush1.msra.mxu0 0.0
    %297 = vmatprep.subr.mxu0 0.0
    %298 = vmatpush1.msra.mxu0 0.0
    %299 = vmatprep.subr.mxu0 0.0
    %300 = vmatpush1.msra.mxu0 0.0
    %301 = vmatprep.subr.mxu0 0.0
    %302 = vmatpush1.msra.mxu0 0.0
    %303 = vmatprep.subr.mxu0 0.0
    %304 = vmatpush1.msra.mxu0 0.0
    %305 = vmatprep.subr.mxu0 0.0
    %306 = vmatpush1.msra.mxu0 0.0
    %307 = vmatprep.subr.mxu0 0.0
    %308 = vmatpush1.msra.mxu0 0.0
    %309 = vmatprep.subr.mxu0 0.0
    %310 = vmatpush1.msra.mxu0 0.0
    %311 = vmatprep.subr.mxu0 0.0
    %312 = vmatpush1.msra.mxu0 0.0
    %313 = vmatprep.subr.mxu0 0.0
    %314 = vmatpush1.msra.mxu0 0.0
    %315 = vmatprep.mubr.f32.mxu0 0.0
    %316 = vmatmul.mubr.f32.gmra.mrb[0].mxu0 %v65
    %v317 = vpop.f32.mrb[0].mxu0
    %v318 = vadd.f32 %v134, %v317
    %v319 = vpop.f32.mrb[0].mxu0
    %320 = vmatprep.mubr.f32.mxu0 0.0
    %321 = vmatmul.mubr.f32.gmra.mrb[0].mxu0 %v66
    %v322 = vpop.f32.mrb[0].mxu0
    %v323 = vadd.f32 %v134, %v322
    %v324 = vpop.f32.mrb[0].mxu0
    %325 = vmatprep.mubr.f32.mxu0 0.0
    %326 = vmatmul.mubr.f32.gmra.mrb[0].mxu0 %v67
    %v327 = vpop.f32.mrb[0].mxu0
    %v328 = vadd.f32 %v134, %v327
    %v329 = vpop.f32.mrb[0].mxu0
    %330 = vmatprep.mubr.f32.mxu0 0.0
    %331 = vmatmul.mubr.f32.gmra.mrb[0].mxu0 %v68
    %v332 = vpop.f32.mrb[0].mxu0
    %v333 = vadd.f32 %v134, %v332
    %v334 = vpop.f32.mrb[0].mxu0
    %335 = vmatprep.mubr.f32.mxu0 0.0
    %336 = vmatmul.mubr.f32.gmra.mrb[0].mxu0 %v69
    %v337 = vpop.f32.mrb[0].mxu0
    %v338 = vadd.f32 %v134, %v337
    %v339 = vpop.f32.mrb[0].mxu0
    %340 = vmatprep.mubr.f32.mxu0 0.0
    %341 = vmatmul.mubr.f32.gmra.mrb[0].mxu0 %v70
    %v342 = vpop.f32.mrb[0].mxu0
    %v343 = vadd.f32 %v134, %v342
    %v344 = vpop.f32.mrb[0].mxu0
    %345 = vmatprep.mubr.f32.mxu0 0.0
    %346 = vmatmul.mubr.f32.gmra.mrb[0].mxu0 %v71
    %v347 = vpop.f32.mrb[0].mxu0
    %v348 = vadd.f32 %v134, %v347
    %v349 = vpop.f32.mrb[0].mxu0
    %350 = vmatprep.mubr.f32.mxu0 0.0
    %351 = vmatmul.mubr.f32.gmra.mrb[0].mxu0 %v72
    %v352 = vpop.f32.mrb[0].mxu0
    %v353 = vadd.f32 %v134, %v352
    %v354 = vpop.f32.mrb[0].mxu0
    %355 = vdwg.mxu0
    %v356 = vlaneseq
    %v357 = vand.u32 %v356, 127
    %v358 = vadd.s32 %v357, 128
    %v359 = vadd.s32 %v357, 256
    %vm360 = vcmp.lt.s32.totalorder %v357, 0
    %v361 = vsub.s32 0, %v357
    %v362 = vsel %vm360, %v361, %v357
    %v363 = vshrl.u32 %v362, 7
    %v364 = vand.u32 %v362, 127
    %v365 = vsub.s32 0, %v364
    %v366 = vsel %vm360, %v365, %v364
    %vm367 = vcmp.lt.s32.totalorder %v358, 0
    %v368 = vsub.s32 0, %v358
    %v369 = vsel %vm367, %v368, %v358
    %v370 = vshrl.u32 %v369, 7
    %v371 = vand.u32 %v369, 127
    %v372 = vsub.s32 0, %v371
    %v373 = vsel %vm367, %v372, %v371
    %vm374 = vcmp.lt.s32.totalorder %v359, 0
    %v375 = vsub.s32 0, %v359
    %v376 = vsel %vm374, %v375, %v359
    %v377 = vshrl.u32 %v376, 7
    %v378 = vand.u32 %v376, 127
    %v379 = vsub.s32 0, %v378
    %v380 = vsel %vm374, %v379, %v378
    %vm381 = vcmp.ne.s32.totalorder %v366, 0
    %vm382 = vcmp.ne.s32.totalorder %v373, 0
    %vm383 = vcmp.ne.s32.totalorder %v380, 0
    %vm384 = vcmp.lt.s32.totalorder %v366, 0
    %vm385 = vcmp.lt.s32.totalorder %v373, 0
    %vm386 = vcmp.lt.s32.totalorder %v380, 0
    %vm387 = vmand %vm384, %vm381
    %vm388 = vmand %vm385, %vm382
    %vm389 = vmand %vm386, %vm383
    %v390 = vadd.s32 %v366, 128
    %v391 = vadd.s32 %v373, 128
    %v392 = vadd.s32 %v380, 128
    %v393 = vsel %vm387, %v390, %v366
    %v394 = vsel %vm388, %v391, %v373
    %v395 = vsel %vm389, %v392, %v380
    %vm396 = vcmp.lt.s32.totalorder %v393, 64
    %vm397 = vcmp.lt.s32.totalorder %v394, 64
    %vm398 = vcmp.lt.s32.totalorder %v395, 64
    %v399 = vsel %vm396, 1, 0
    %v400 = vsel %vm397, 1, 0
    %v401 = vsel %vm398, 1, 0
    %vm402 = vcmp.eq.s32.totalorder %v399, 1
    %vm403 = vcmp.eq.s32.totalorder %v400, 1
    %vm404 = vcmp.eq.s32.totalorder %v401, 1
    %v405 = vsel %vm402, %v205, %v247
    %v406 = vsel %vm403, %v207, %v249
    %v407 = vsel %vm404, %v318, %v353
    %408 = vst [vmem:[#allocation2] sm:$0xff] %v405
    %409 = vst [vmem:[#allocation2 + $0x8] sm:$0xff] %v406
    %410 = vst [vmem:[#allocation2 + $0x10] sm:$0xff] %v407
    %v411 = vsel %vm402, %v211, %v241
    %v412 = vsel %vm403, %v213, %v243
    %v413 = vsel %vm404, %v323, %v348
    %s414 = scalar_lea.vmem [#allocation2], 24
    %415 = vst [vmem:[%s414] sm:$0xff] %v411
    %416 = vst [vmem:[%s414 + $0x8] sm:$0xff] %v412
    %417 = vst [vmem:[%s414 + $0x10] sm:$0xff] %v413
    %v418 = vsel %vm402, %v217, %v235
    %v419 = vsel %vm403, %v219, %v237
    %v420 = vsel %vm404, %v328, %v343
    %s421 = scalar_lea.vmem [#allocation2], 48
    %422 = vst [vmem:[%s421] sm:$0xff] %v418
    %423 = vst [vmem:[%s421 + $0x8] sm:$0xff] %v419
    %424 = vst [vmem:[%s421 + $0x10] sm:$0xff] %v420
    %v425 = vsel %vm402, %v223, %v229
    %v426 = vsel %vm403, %v225, %v231
    %v427 = vsel %vm404, %v333, %v338
    %s428 = scalar_lea.vmem [#allocation2], 72
    %429 = vst [vmem:[%s428] sm:$0xff] %v425
    %430 = vst [vmem:[%s428 + $0x8] sm:$0xff] %v426
    %431 = vst [vmem:[%s428 + $0x10] sm:$0xff] %v427
    %v432 = vsel %vm402, %v229, %v223
    %v433 = vsel %vm403, %v231, %v225
    %v434 = vsel %vm404, %v338, %v333
    %s435 = scalar_lea.vmem [#allocation2], 96
    %436 = vst [vmem:[%s435] sm:$0xff] %v432
    %437 = vst [vmem:[%s435 + $0x8] sm:$0xff] %v433
    %438 = vst [vmem:[%s435 + $0x10] sm:$0xff] %v434
    %v439 = vsel %vm402, %v235, %v217
    %v440 = vsel %vm403, %v237, %v219
    %v441 = vsel %vm404, %v343, %v328
    %s442 = scalar_lea.vmem [#allocation2], 120
    %443 = vst [vmem:[%s442] sm:$0xff] %v439
    %444 = vst [vmem:[%s442 + $0x8] sm:$0xff] %v440
    %445 = vst [vmem:[%s442 + $0x10] sm:$0xff] %v441
    %v446 = vsel %vm402, %v241, %v211
    %v447 = vsel %vm403, %v243, %v213
    %v448 = vsel %vm404, %v348, %v323
    %s449 = scalar_lea.vmem [#allocation2], 144
    %450 = vst [vmem:[%s449] sm:$0xff] %v446
    %451 = vst [vmem:[%s449 + $0x8] sm:$0xff] %v447
    %452 = vst [vmem:[%s449 + $0x10] sm:$0xff] %v448
    %v453 = vsel %vm402, %v247, %v205
    %v454 = vsel %vm403, %v249, %v207
    %v455 = vsel %vm404, %v353, %v318
    %s456 = scalar_lea.vmem [#allocation2], 168
    %457 = vst [vmem:[%s456] sm:$0xff] %v453
    %458 = vst [vmem:[%s456 + $0x8] sm:$0xff] %v454
    %459 = vst [vmem:[%s456 + $0x10] sm:$0xff] %v455
    %vm460 = vcmp.lt.s32.totalorder %v357, 64
    %v461 = vld [vmem:[%s5] sm:$0xff]
    %v462 = vld [vmem:[#allocation8] sm:$0xff]
    %v463 = vld [vmem:[#allocation8 + $0x8] sm:$0xff]
    %v464 = vld [vmem:[#allocation8 + $0x10] sm:$0xff]
    %v465 = vld [vmem:[#allocation8 + $0x18] sm:$0xff]
    %v466 = vld [vmem:[#allocation8 + $0x20] sm:$0xff]
    %v467 = vld [vmem:[#allocation8 + $0x28] sm:$0xff]
    %v468 = vld [vmem:[#allocation8 + $0x30] sm:$0xff]
    %v469 = vld [vmem:[#allocation8 + $0x38] sm:$0xff]
    %v470 = vld [vmem:[#allocation8 + $0x40] sm:$0xff]
    %v471 = vld [vmem:[#allocation8 + $0x48] sm:$0xff]
    %v472 = vld [vmem:[#allocation8 + $0x50] sm:$0xff]
    %v473 = vld [vmem:[#allocation8 + $0x58] sm:$0xff]
    %v474 = vld [vmem:[#allocation8 + $0x60] sm:$0xff]
    %v475 = vld [vmem:[#allocation8 + $0x68] sm:$0xff]
    %v476 = vld [vmem:[#allocation8 + $0x70] sm:$0xff]
    %v477 = vld [vmem:[#allocation8 + $0x78] sm:$0xff]
    %v478 = vld [vmem:[#allocation8 + $0x80] sm:$0xff]
    %v479 = vld [vmem:[#allocation8 + $0x88] sm:$0xff]
    %v480 = vld [vmem:[#allocation8 + $0x90] sm:$0xff]
    %v481 = vld [vmem:[#allocation8 + $0x98] sm:$0xff]
    %v482 = vld [vmem:[#allocation8 + $0xa0] sm:$0xff]
    %v483 = vld [vmem:[#allocation8 + $0xa8] sm:$0xff]
    %v484 = vld [vmem:[#allocation8 + $0xb0] sm:$0xff]
    %v485 = vld [vmem:[#allocation8 + $0xb8] sm:$0xff]
    %v486 = vld [vmem:[#allocation8 + $0xc0] sm:$0xff]
    %v487 = vld [vmem:[#allocation8 + $0xc8] sm:$0xff]
    %v488 = vld [vmem:[#allocation8 + $0xd0] sm:$0xff]
    %v489 = vld [vmem:[#allocation8 + $0xd8] sm:$0xff]
    %v490 = vld [vmem:[#allocation8 + $0xe0] sm:$0xff]
    %v491 = vld [vmem:[#allocation8 + $0xe8] sm:$0xff]
    %v492 = vld [vmem:[#allocation8 + $0xf0] sm:$0xff]
    %v493 = vld [vmem:[#allocation8 + $0xf8] sm:$0xff]
    %v494 = vld [vmem:[#allocation8 + $0x100] sm:$0xff]
    %v495 = vld [vmem:[#allocation8 + $0x108] sm:$0xff]
    %v496 = vld [vmem:[#allocation8 + $0x110] sm:$0xff]
    %v497 = vld [vmem:[#allocation8 + $0x118] sm:$0xff]
    %v498 = vld [vmem:[#allocation8 + $0x120] sm:$0xff]
    %v499 = vld [vmem:[#allocation8 + $0x128] sm:$0xff]
    %v500 = vld [vmem:[#allocation8 + $0x130] sm:$0xff]
    %v501 = vld [vmem:[#allocation8 + $0x138] sm:$0xff]
    %v502 = vld [vmem:[#allocation8 + $0x140] sm:$0xff]
    %v503 = vld [vmem:[#allocation8 + $0x148] sm:$0xff]
    %v504 = vld [vmem:[#allocation8 + $0x150] sm:$0xff]
    %v505 = vld [vmem:[#allocation8 + $0x158] sm:$0xff]
    %v506 = vld [vmem:[#allocation8 + $0x160] sm:$0xff]
    %v507 = vld [vmem:[#allocation8 + $0x168] sm:$0xff]
    %v508 = vld [vmem:[#allocation8 + $0x170] sm:$0xff]
    %v509 = vld [vmem:[#allocation8 + $0x178] sm:$0xff]
    %v510 = vld [vmem:[%s4] sm:$0x1]
    %v511 = vld [vmem:[#allocation2] sm:$0xff]
    %v512 = vld [vmem:[#allocation2 + $0x8] sm:$0xff]
    %v513 = vld [vmem:[#allocation2 + $0x10] sm:$0xff]
    %514 = vmatprep.subr.mxu0 %v463
    %515 = vmatpush1.msra.mxu0 %v462
    %516 = vmatprep.subr.mxu0 %v466
    %517 = vmatpush1.msra.mxu0 %v465
    %518 = vmatprep.subr.mxu0 %v469
    %519 = vmatpush1.msra.mxu0 %v468
    %520 = vmatprep.subr.mxu0 %v472
    %521 = vmatpush1.msra.mxu0 %v471
    %522 = vmatprep.subr.mxu0 %v475
    %523 = vmatpush1.msra.mxu0 %v474
    %524 = vmatprep.subr.mxu0 %v478
    %525 = vmatpush1.msra.mxu0 %v477
    %526 = vmatprep.subr.mxu0 %v481
    %527 = vmatpush1.msra.mxu0 %v480
    %528 = vmatprep.subr.mxu0 %v484
    %529 = vmatpush1.msra.mxu0 %v483
    %530 = vmatprep.subr.mxu0 %v487
    %531 = vmatpush1.msra.mxu0 %v486
    %532 = vmatprep.subr.mxu0 %v490
    %533 = vmatpush1.msra.mxu0 %v489
    %534 = vmatprep.subr.mxu0 %v493
    %535 = vmatpush1.msra.mxu0 %v492
    %536 = vmatprep.subr.mxu0 %v496
    %537 = vmatpush1.msra.mxu0 %v495
    %538 = vmatprep.subr.mxu0 %v499
    %539 = vmatpush1.msra.mxu0 %v498
    %540 = vmatprep.subr.mxu0 %v502
    %541 = vmatpush1.msra.mxu0 %v501
    %542 = vmatprep.subr.mxu0 %v505
    %543 = vmatpush1.msra.mxu0 %v504
    %544 = vmatprep.subr.mxu0 %v508
    %545 = vmatpush1.msra.mxu0 %v507
    %546 = vmatprep.subr.mxu0 0.0
    %547 = vmatpush1.msra.mxu0 0.0
    %548 = vmatprep.subr.mxu0 0.0
    %549 = vmatpush1.msra.mxu0 0.0
    %550 = vmatprep.subr.mxu0 0.0
    %551 = vmatpush1.msra.mxu0 0.0
    %552 = vmatprep.subr.mxu0 0.0
    %553 = vmatpush1.msra.mxu0 0.0
    %554 = vmatprep.subr.mxu0 0.0
    %555 = vmatpush1.msra.mxu0 0.0
    %556 = vmatprep.subr.mxu0 0.0
    %557 = vmatpush1.msra.mxu0 0.0
    %558 = vmatprep.subr.mxu0 0.0
    %559 = vmatpush1.msra.mxu0 0.0
    %560 = vmatprep.subr.mxu0 0.0
    %561 = vmatpush1.msra.mxu0 0.0
    %562 = vmatprep.subr.mxu0 0.0
    %563 = vmatpush1.msra.mxu0 0.0
    %564 = vmatprep.subr.mxu0 0.0
    %565 = vmatpush1.msra.mxu0 0.0
    %566 = vmatprep.subr.mxu0 0.0
    %567 = vmatpush1.msra.mxu0 0.0
    %568 = vmatprep.subr.mxu0 0.0
    %569 = vmatpush1.msra.mxu0 0.0
    %570 = vmatprep.subr.mxu0 0.0
    %571 = vmatpush1.msra.mxu0 0.0
    %572 = vmatprep.subr.mxu0 0.0
    %573 = vmatpush1.msra.mxu0 0.0
    %574 = vmatprep.subr.mxu0 0.0
    %575 = vmatpush1.msra.mxu0 0.0
    %576 = vmatprep.subr.mxu0 0.0
    %577 = vmatpush1.msra.mxu0 0.0
    %578 = vmatprep.mubr.f32.mxu0 0.0
    %579 = vmatmul.mubr.f32.gmra.mrb[0].mxu0 0.0
    %v580 = vpop.f32.mrb[0].mxu0
    %v581 = vadd.f32 0.0, %v580
    %v582 = vpop.f32.mrb[0].mxu0
    %v583 = vadd.f32 0.0, %v582
    %584 = vdwg.mxu0
    %585 = vmatprep.subr.mxu0 0.0
    %586 = vmatpush1.msra.mxu0 %v464
    %587 = vmatprep.subr.mxu0 0.0
    %588 = vmatpush1.msra.mxu0 %v467
    %589 = vmatprep.subr.mxu0 0.0
    %590 = vmatpush1.msra.mxu0 %v470
    %591 = vmatprep.subr.mxu0 0.0
    %592 = vmatpush1.msra.mxu0 %v473
    %593 = vmatprep.subr.mxu0 0.0
    %594 = vmatpush1.msra.mxu0 %v476
    %595 = vmatprep.subr.mxu0 0.0
    %596 = vmatpush1.msra.mxu0 %v479
    %597 = vmatprep.subr.mxu0 0.0
    %598 = vmatpush1.msra.mxu0 %v482
    %599 = vmatprep.subr.mxu0 0.0
    %600 = vmatpush1.msra.mxu0 %v485
    %601 = vmatprep.subr.mxu0 0.0
    %602 = vmatpush1.msra.mxu0 %v488
    %603 = vmatprep.subr.mxu0 0.0
    %604 = vmatpush1.msra.mxu0 %v491
    %605 = vmatprep.subr.mxu0 0.0
    %606 = vmatpush1.msra.mxu0 %v494
    %607 = vmatprep.subr.mxu0 0.0
    %608 = vmatpush1.msra.mxu0 %v497
    %609 = vmatprep.subr.mxu0 0.0
    %610 = vmatpush1.msra.mxu0 %v500
    %611 = vmatprep.subr.mxu0 0.0
    %612 = vmatpush1.msra.mxu0 %v503
    %613 = vmatprep.subr.mxu0 0.0
    %614 = vmatpush1.msra.mxu0 %v506
    %615 = vmatprep.subr.mxu0 0.0
    %616 = vmatpush1.msra.mxu0 %v509
    %617 = vmatprep.subr.mxu0 0.0
    %618 = vmatpush1.msra.mxu0 0.0
    %619 = vmatprep.subr.mxu0 0.0
    %620 = vmatpush1.msra.mxu0 0.0
    %621 = vmatprep.subr.mxu0 0.0
    %622 = vmatpush1.msra.mxu0 0.0
    %623 = vmatprep.subr.mxu0 0.0
    %624 = vmatpush1.msra.mxu0 0.0
    %625 = vmatprep.subr.mxu0 0.0
    %626 = vmatpush1.msra.mxu0 0.0
    %627 = vmatprep.subr.mxu0 0.0
    %628 = vmatpush1.msra.mxu0 0.0
    %629 = vmatprep.subr.mxu0 0.0
    %630 = vmatpush1.msra.mxu0 0.0
    %631 = vmatprep.subr.mxu0 0.0
    %632 = vmatpush1.msra.mxu0 0.0
    %633 = vmatprep.subr.mxu0 0.0
    %634 = vmatpush1.msra.mxu0 0.0
    %635 = vmatprep.subr.mxu0 0.0
    %636 = vmatpush1.msra.mxu0 0.0
    %637 = vmatprep.subr.mxu0 0.0
    %638 = vmatpush1.msra.mxu0 0.0
    %639 = vmatprep.subr.mxu0 0.0
    %640 = vmatpush1.msra.mxu0 0.0
    %641 = vmatprep.subr.mxu0 0.0
    %642 = vmatpush1.msra.mxu0 0.0
    %643 = vmatprep.subr.mxu0 0.0
    %644 = vmatpush1.msra.mxu0 0.0
    %645 = vmatprep.subr.mxu0 0.0
    %646 = vmatpush1.msra.mxu0 0.0
    %647 = vmatprep.subr.mxu0 0.0
    %648 = vmatpush1.msra.mxu0 0.0
    %649 = vmatprep.mubr.f32.mxu0 0.0
    %650 = vmatmul.mubr.f32.gmra.mrb[0].mxu0 0.0
    %v651 = vpop.f32.mrb[0].mxu0
    %v652 = vadd.f32 0.0, %v651
    %v653 = vpop.f32.mrb[0].mxu0
    %654 = vdwg.mxu0
    %v655 = vadd.f32 %v511, %v581
    %v656 = vxor.u32 %v655, 2147483648
    %v657 = vmul.f32 %v656, 1.442695
    %v658 = vpow.pop %v657
    %v659 = vadd.f32 %v658, 1.0
    %v660 = vrcp.pop %v659
    %v661 = vmul.f32 1.0, %v660
    %v662 = vadd.f32 %v512, %v583
    %v663 = vxor.u32 %v662, 2147483648
    %v664 = vmul.f32 %v663, 1.442695
    %v665 = vpow.pop %v664
    %v666 = vadd.f32 %v665, 1.0
    %v667 = vrcp.pop %v666
    %v668 = vmul.f32 1.0, %v667
    %v670 = vlaneseq
    %v671 = vshrl.u32 %v670, 7
    %v672 = vsub.s32 0, %v671
    %v673 = vrot.slane %v510, %v672
    %v675 = vadd.f32 %v652, %v673
    %v676 = vmul.f32 %v661, %v675
    %v677 = vadd.f32 %v513, %v676
    %v678 = vtanh.pop %v677
    %v679 = vsub.f32 1.0, %v668
    %v680 = vmul.f32 %v679, %v678
    %v681 = vmul.f32 %v668, 0.0
    %v682 = vadd.f32 %v680, %v681
    %v683 = vsel %vm460, 0, 7
    %684 = vset.pattern.permute.xlu0 0
    %685 = vperm.xlu0 %684, %v461
    %v686 = vpop.permute.xlu0 %685
    %vm687 = vcmp.lt.s32.totalorder %v683, %v686
    %v688 = vsel %vm687, %v682, 0.0
    %689 = vst [vmem:[#allocation9] sm:$0xff] %v688
    %v690 = vld [vmem:[%s414] sm:$0xff]
    %v691 = vld [vmem:[%s414 + $0x8] sm:$0xff]
    %v692 = vld [vmem:[%s414 + $0x10] sm:$0xff]
    %693 = vmatprep.subr.mxu0 %v463
    %694 = vmatpush1.msra.mxu0 %v462
    %695 = vmatprep.subr.mxu0 %v466
    %696 = vmatpush1.msra.mxu0 %v465
    %697 = vmatprep.subr.mxu0 %v469
    %698 = vmatpush1.msra.mxu0 %v468
    %699 = vmatprep.subr.mxu0 %v472
    %700 = vmatpush1.msra.mxu0 %v471
    %701 = vmatprep.subr.mxu0 %v475
    %702 = vmatpush1.msra.mxu0 %v474
    %703 = vmatprep.subr.mxu0 %v478
    %704 = vmatpush1.msra.mxu0 %v477
    %705 = vmatprep.subr.mxu0 %v481
    %706 = vmatpush1.msra.mxu0 %v480
    %707 = vmatprep.subr.mxu0 %v484
    %708 = vmatpush1.msra.mxu0 %v483
    %709 = vmatprep.subr.mxu0 %v487
    %710 = vmatpush1.msra.mxu0 %v486
    %711 = vmatprep.subr.mxu0 %v490
    %712 = vmatpush1.msra.mxu0 %v489
    %713 = vmatprep.subr.mxu0 %v493
    %714 = vmatpush1.msra.mxu0 %v492
    %715 = vmatprep.subr.mxu0 %v496
    %716 = vmatpush1.msra.mxu0 %v495
    %717 = vmatprep.subr.mxu0 %v499
    %718 = vmatpush1.msra.mxu0 %v498
    %719 = vmatprep.subr.mxu0 %v502
    %720 = vmatpush1.msra.mxu0 %v501
    %721 = vmatprep.subr.mxu0 %v505
    %722 = vmatpush1.msra.mxu0 %v504
    %723 = vmatprep.subr.mxu0 %v508
    %724 = vmatpush1.msra.mxu0 %v507
    %725 = vmatprep.subr.mxu0 0.0
    %726 = vmatpush1.msra.mxu0 0.0
    %727 = vmatprep.subr.mxu0 0.0
    %728 = vmatpush1.msra.mxu0 0.0
    %729 = vmatprep.subr.mxu0 0.0
    %730 = vmatpush1.msra.mxu0 0.0
    %731 = vmatprep.subr.mxu0 0.0
    %732 = vmatpush1.msra.mxu0 0.0
    %733 = vmatprep.subr.mxu0 0.0
    %734 = vmatpush1.msra.mxu0 0.0
    %735 = vmatprep.subr.mxu0 0.0
    %736 = vmatpush1.msra.mxu0 0.0
    %737 = vmatprep.subr.mxu0 0.0
    %738 = vmatpush1.msra.mxu0 0.0
    %739 = vmatprep.subr.mxu0 0.0
    %740 = vmatpush1.msra.mxu0 0.0
    %741 = vmatprep.subr.mxu0 0.0
    %742 = vmatpush1.msra.mxu0 0.0
    %743 = vmatprep.subr.mxu0 0.0
    %744 = vmatpush1.msra.mxu0 0.0
    %745 = vmatprep.subr.mxu0 0.0
    %746 = vmatpush1.msra.mxu0 0.0
    %747 = vmatprep.subr.mxu0 0.0
    %748 = vmatpush1.msra.mxu0 0.0
    %749 = vmatprep.subr.mxu0 0.0
    %750 = vmatpush1.msra.mxu0 0.0
    %751 = vmatprep.subr.mxu0 0.0
    %752 = vmatpush1.msra.mxu0 0.0
    %753 = vmatprep.subr.mxu0 0.0
    %754 = vmatpush1.msra.mxu0 0.0
    %755 = vmatprep.subr.mxu0 0.0
    %756 = vmatpush1.msra.mxu0 0.0
    %757 = vmatprep.mubr.f32.mxu0 0.0
    %758 = vmatmul.mubr.f32.gmra.mrb[0].mxu0 %v688
    %v759 = vpop.f32.mrb[0].mxu0
    %v760 = vadd.f32 0.0, %v759
    %v761 = vpop.f32.mrb[0].mxu0
    %v762 = vadd.f32 0.0, %v761
    %763 = vdwg.mxu0
    %764 = vmatprep.subr.mxu0 0.0
    %765 = vmatpush1.msra.mxu0 %v464
    %766 = vmatprep.subr.mxu0 0.0
    %767 = vmatpush1.msra.mxu0 %v467
    %768 = vmatprep.subr.mxu0 0.0
    %769 = vmatpush1.msra.mxu0 %v470
    %770 = vmatprep.subr.mxu0 0.0
    %771 = vmatpush1.msra.mxu0 %v473
    %772 = vmatprep.subr.mxu0 0.0
    %773 = vmatpush1.msra.mxu0 %v476
    %774 = vmatprep.subr.mxu0 0.0
    %775 = vmatpush1.msra.mxu0 %v479
    %776 = vmatprep.subr.mxu0 0.0
    %777 = vmatpush1.msra.mxu0 %v482
    %778 = vmatprep.subr.mxu0 0.0
    %779 = vmatpush1.msra.mxu0 %v485
    %780 = vmatprep.subr.mxu0 0.0
    %781 = vmatpush1.msra.mxu0 %v488
    %782 = vmatprep.subr.mxu0 0.0
    %783 = vmatpush1.msra.mxu0 %v491
    %784 = vmatprep.subr.mxu0 0.0
    %785 = vmatpush1.msra.mxu0 %v494
    %786 = vmatprep.subr.mxu0 0.0
    %787 = vmatpush1.msra.mxu0 %v497
    %788 = vmatprep.subr.mxu0 0.0
    %789 = vmatpush1.msra.mxu0 %v500
    %790 = vmatprep.subr.mxu0 0.0
    %791 = vmatpush1.msra.mxu0 %v503
    %792 = vmatprep.subr.mxu0 0.0
    %793 = vmatpush1.msra.mxu0 %v506
    %794 = vmatprep.subr.mxu0 0.0
    %795 = vmatpush1.msra.mxu0 %v509
    %796 = vmatprep.subr.mxu0 0.0
    %797 = vmatpush1.msra.mxu0 0.0
    %798 = vmatprep.subr.mxu0 0.0
    %799 = vmatpush1.msra.mxu0 0.0
    %800 = vmatprep.subr.mxu0 0.0
    %801 = vmatpush1.msra.mxu0 0.0
    %802 = vmatprep.subr.mxu0 0.0
    %803 = vmatpush1.msra.mxu0 0.0
    %804 = vmatprep.subr.mxu0 0.0
    %805 = vmatpush1.msra.mxu0 0.0
    %806 = vmatprep.subr.mxu0 0.0
    %807 = vmatpush1.msra.mxu0 0.0
    %808 = vmatprep.subr.mxu0 0.0
    %809 = vmatpush1.msra.mxu0 0.0
    %810 = vmatprep.subr.mxu0 0.0
    %811 = vmatpush1.msra.mxu0 0.0
    %812 = vmatprep.subr.mxu0 0.0
    %813 = vmatpush1.msra.mxu0 0.0
    %814 = vmatprep.subr.mxu0 0.0
    %815 = vmatpush1.msra.mxu0 0.0
    %816 = vmatprep.subr.mxu0 0.0
    %817 = vmatpush1.msra.mxu0 0.0
    %818 = vmatprep.subr.mxu0 0.0
    %819 = vmatpush1.msra.mxu0 0.0
    %820 = vmatprep.subr.mxu0 0.0
    %821 = vmatpush1.msra.mxu0 0.0
    %822 = vmatprep.subr.mxu0 0.0
    %823 = vmatpush1.msra.mxu0 0.0
    %824 = vmatprep.subr.mxu0 0.0
    %825 = vmatpush1.msra.mxu0 0.0
    %826 = vmatprep.subr.mxu0 0.0
    %827 = vmatpush1.msra.mxu0 0.0
    %828 = vmatprep.mubr.f32.mxu0 0.0
    %829 = vmatmul.mubr.f32.gmra.mrb[0].mxu0 %v688
    %v830 = vpop.f32.mrb[0].mxu0
    %v831 = vadd.f32 0.0, %v830
    %v832 = vpop.f32.mrb[0].mxu0
    %833 = vdwg.mxu0
    %v834 = vadd.f32 %v690, %v760
    %v835 = vxor.u32 %v834, 2147483648
    %v836 = vmul.f32 %v835, 1.442695
    %v837 = vpow.pop %v836
    %v838 = vadd.f32 %v837, 1.0
    %v839 = vrcp.pop %v838
    %v840 = vmul.f32 1.0, %v839
    %v841 = vadd.f32 %v691, %v762
    %v842 = vxor.u32 %v841, 2147483648
    %v843 = vmul.f32 %v842, 1.442695
    %v844 = vpow.pop %v843
    %v845 = vadd.f32 %v844, 1.0
    %v846 = vrcp.pop %v845
    %v847 = vmul.f32 1.0, %v846
    %v848 = vadd.f32 %v831, %v673
    %v849 = vmul.f32 %v840, %v848
    %v850 = vadd.f32 %v692, %v849
    %v851 = vtanh.pop %v850
    %v852 = vsub.f32 1.0, %v847
    %v853 = vmul.f32 %v852, %v851
    %v854 = vmul.f32 %v847, %v688
    %v855 = vadd.f32 %v853, %v854
    %v856 = vsel %vm460, 1, 6
    %vm857 = vcmp.lt.s32.totalorder %v856, %v686
    %v858 = vsel %vm857, %v855, 0.0
    %v859 = vsel %vm857, %v855, %v688
    %s860 = scalar_lea.vmem [#allocation9], 8
    %861 = vst [vmem:[%s860] sm:$0xff] %v858
    %v862 = vld [vmem:[%s421] sm:$0xff]
    %v863 = vld [vmem:[%s421 + $0x8] sm:$0xff]
    %v864 = vld [vmem:[%s421 + $0x10] sm:$0xff]
    %865 = vmatprep.subr.mxu0 %v463
    %866 = vmatpush1.msra.mxu0 %v462
    %867 = vmatprep.subr.mxu0 %v466
    %868 = vmatpush1.msra.mxu0 %v465
    %869 = vmatprep.subr.mxu0 %v469
    %870 = vmatpush1.msra.mxu0 %v468
    %871 = vmatprep.subr.mxu0 %v472
    %872 = vmatpush1.msra.mxu0 %v471
    %873 = vmatprep.subr.mxu0 %v475
    %874 = vmatpush1.msra.mxu0 %v474
    %875 = vmatprep.subr.mxu0 %v478
    %876 = vmatpush1.msra.mxu0 %v477
    %877 = vmatprep.subr.mxu0 %v481
    %878 = vmatpush1.msra.mxu0 %v480
    %879 = vmatprep.subr.mxu0 %v484
    %880 = vmatpush1.msra.mxu0 %v483
    %881 = vmatprep.subr.mxu0 %v487
    %882 = vmatpush1.msra.mxu0 %v486
    %883 = vmatprep.subr.mxu0 %v490
    %884 = vmatpush1.msra.mxu0 %v489
    %885 = vmatprep.subr.mxu0 %v493
    %886 = vmatpush1.msra.mxu0 %v492
    %887 = vmatprep.subr.mxu0 %v496
    %888 = vmatpush1.msra.mxu0 %v495
    %889 = vmatprep.subr.mxu0 %v499
    %890 = vmatpush1.msra.mxu0 %v498
    %891 = vmatprep.subr.mxu0 %v502
    %892 = vmatpush1.msra.mxu0 %v501
    %893 = vmatprep.subr.mxu0 %v505
    %894 = vmatpush1.msra.mxu0 %v504
    %895 = vmatprep.subr.mxu0 %v508
    %896 = vmatpush1.msra.mxu0 %v507
    %897 = vmatprep.subr.mxu0 0.0
    %898 = vmatpush1.msra.mxu0 0.0
    %899 = vmatprep.subr.mxu0 0.0
    %900 = vmatpush1.msra.mxu0 0.0
    %901 = vmatprep.subr.mxu0 0.0
    %902 = vmatpush1.msra.mxu0 0.0
    %903 = vmatprep.subr.mxu0 0.0
    %904 = vmatpush1.msra.mxu0 0.0
    %905 = vmatprep.subr.mxu0 0.0
    %906 = vmatpush1.msra.mxu0 0.0
    %907 = vmatprep.subr.mxu0 0.0
    %908 = vmatpush1.msra.mxu0 0.0
    %909 = vmatprep.subr.mxu0 0.0
    %910 = vmatpush1.msra.mxu0 0.0
    %911 = vmatprep.subr.mxu0 0.0
    %912 = vmatpush1.msra.mxu0 0.0
    %913 = vmatprep.subr.mxu0 0.0
    %914 = vmatpush1.msra.mxu0 0.0
    %915 = vmatprep.subr.mxu0 0.0
    %916 = vmatpush1.msra.mxu0 0.0
    %917 = vmatprep.subr.mxu0 0.0
    %918 = vmatpush1.msra.mxu0 0.0
    %919 = vmatprep.subr.mxu0 0.0
    %920 = vmatpush1.msra.mxu0 0.0
    %921 = vmatprep.subr.mxu0 0.0
    %922 = vmatpush1.msra.mxu0 0.0
    %923 = vmatprep.subr.mxu0 0.0
    %924 = vmatpush1.msra.mxu0 0.0
    %925 = vmatprep.subr.mxu0 0.0
    %926 = vmatpush1.msra.mxu0 0.0
    %927 = vmatprep.subr.mxu0 0.0
    %928 = vmatpush1.msra.mxu0 0.0
    %929 = vmatprep.mubr.f32.mxu0 0.0
    %930 = vmatmul.mubr.f32.gmra.mrb[0].mxu0 %v859
    %v931 = vpop.f32.mrb[0].mxu0
    %v932 = vadd.f32 0.0, %v931
    %v933 = vpop.f32.mrb[0].mxu0
    %v934 = vadd.f32 0.0, %v933
    %935 = vdwg.mxu0
    %936 = vmatprep.subr.mxu0 0.0
    %937 = vmatpush1.msra.mxu0 %v464
    %938 = vmatprep.subr.mxu0 0.0
    %939 = vmatpush1.msra.mxu0 %v467
    %940 = vmatprep.subr.mxu0 0.0
    %941 = vmatpush1.msra.mxu0 %v470
    %942 = vmatprep.subr.mxu0 0.0
    %943 = vmatpush1.msra.mxu0 %v473
    %944 = vmatprep.subr.mxu0 0.0
    %945 = vmatpush1.msra.mxu0 %v476
    %946 = vmatprep.subr.mxu0 0.0
    %947 = vmatpush1.msra.mxu0 %v479
    %948 = vmatprep.subr.mxu0 0.0
    %949 = vmatpush1.msra.mxu0 %v482
    %950 = vmatprep.subr.mxu0 0.0
    %951 = vmatpush1.msra.mxu0 %v485
    %952 = vmatprep.subr.mxu0 0.0
    %953 = vmatpush1.msra.mxu0 %v488
    %954 = vmatprep.subr.mxu0 0.0
    %955 = vmatpush1.msra.mxu0 %v491
    %956 = vmatprep.subr.mxu0 0.0
    %957 = vmatpush1.msra.mxu0 %v494
    %958 = vmatprep.subr.mxu0 0.0
    %959 = vmatpush1.msra.mxu0 %v497
    %960 = vmatprep.subr.mxu0 0.0
    %961 = vmatpush1.msra.mxu0 %v500
    %962 = vmatprep.subr.mxu0 0.0
    %963 = vmatpush1.msra.mxu0 %v503
    %964 = vmatprep.subr.mxu0 0.0
    %965 = vmatpush1.msra.mxu0 %v506
    %966 = vmatprep.subr.mxu0 0.0
    %967 = vmatpush1.msra.mxu0 %v509
    %968 = vmatprep.subr.mxu0 0.0
    %969 = vmatpush1.msra.mxu0 0.0
    %970 = vmatprep.subr.mxu0 0.0
    %971 = vmatpush1.msra.mxu0 0.0
    %972 = vmatprep.subr.mxu0 0.0
    %973 = vmatpush1.msra.mxu0 0.0
    %974 = vmatprep.subr.mxu0 0.0
    %975 = vmatpush1.msra.mxu0 0.0
    %976 = vmatprep.subr.mxu0 0.0
    %977 = vmatpush1.msra.mxu0 0.0
    %978 = vmatprep.subr.mxu0 0.0
    %979 = vmatpush1.msra.mxu0 0.0
    %980 = vmatprep.subr.mxu0 0.0
    %981 = vmatpush1.msra.mxu0 0.0
    %982 = vmatprep.subr.mxu0 0.0
    %983 = vmatpush1.msra.mxu0 0.0
    %984 = vmatprep.subr.mxu0 0.0
    %985 = vmatpush1.msra.mxu0 0.0
    %986 = vmatprep.subr.mxu0 0.0
    %987 = vmatpush1.msra.mxu0 0.0
    %988 = vmatprep.subr.mxu0 0.0
    %989 = vmatpush1.msra.mxu0 0.0
    %990 = vmatprep.subr.mxu0 0.0
    %991 = vmatpush1.msra.mxu0 0.0
    %992 = vmatprep.subr.mxu0 0.0
    %993 = vmatpush1.msra.mxu0 0.0
    %994 = vmatprep.subr.mxu0 0.0
    %995 = vmatpush1.msra.mxu0 0.0
    %996 = vmatprep.subr.mxu0 0.0
    %997 = vmatpush1.msra.mxu0 0.0
    %998 = vmatprep.subr.mxu0 0.0
    %999 = vmatpush1.msra.mxu0 0.0
    %1000 = vmatprep.mubr.f32.mxu0 0.0
    %1001 = vmatmul.mubr.f32.gmra.mrb[0].mxu0 %v859
    %v1002 = vpop.f32.mrb[0].mxu0
    %v1003 = vadd.f32 0.0, %v1002
    %v1004 = vpop.f32.mrb[0].mxu0
    %1005 = vdwg.mxu0
    %v1006 = vadd.f32 %v862, %v932
    %v1007 = vxor.u32 %v1006, 2147483648
    %v1008 = vmul.f32 %v1007, 1.442695
    %v1009 = vpow.pop %v1008
    %v1010 = vadd.f32 %v1009, 1.0
    %v1011 = vrcp.pop %v1010
    %v1012 = vmul.f32 1.0, %v1011
    %v1013 = vadd.f32 %v863, %v934
    %v1014 = vxor.u32 %v1013, 2147483648
    %v1015 = vmul.f32 %v1014, 1.442695
    %v1016 = vpow.pop %v1015
    %v1017 = vadd.f32 %v1016, 1.0
    %v1018 = vrcp.pop %v1017
    %v1019 = vmul.f32 1.0, %v1018
    %v1020 = vadd.f32 %v1003, %v673
    %v1021 = vmul.f32 %v1012, %v1020
    %v1022 = vadd.f32 %v864, %v1021
    %v1023 = vtanh.pop %v1022
    %v1024 = vsub.f32 1.0, %v1019
    %v1025 = vmul.f32 %v1024, %v1023
    %v1026 = vmul.f32 %v1019, %v859
    %v1027 = vadd.f32 %v1025, %v1026
    %v1028 = vsel %vm460, 2, 5
    %vm1029 = vcmp.lt.s32.totalorder %v1028, %v686
    %v1030 = vsel %vm1029, %v1027, 0.0
    %v1031 = vsel %vm1029, %v1027, %v859
    %s1032 = scalar_lea.vmem [#allocation9], 16
    %1033 = vst [vmem:[%s1032] sm:$0xff] %v1030
    %v1034 = vld [vmem:[%s428] sm:$0xff]
    %v1035 = vld [vmem:[%s428 + $0x8] sm:$0xff]
    %v1036 = vld [vmem:[%s428 + $0x10] sm:$0xff]
    %1037 = vmatprep.subr.mxu0 %v463
    %1038 = vmatpush1.msra.mxu0 %v462
    %1039 = vmatprep.subr.mxu0 %v466
    %1040 = vmatpush1.msra.mxu0 %v465
    %1041 = vmatprep.subr.mxu0 %v469
    %1042 = vmatpush1.msra.mxu0 %v468
    %1043 = vmatprep.subr.mxu0 %v472
    %1044 = vmatpush1.msra.mxu0 %v471
    %1045 = vmatprep.subr.mxu0 %v475
    %1046 = vmatpush1.msra.mxu0 %v474
    %1047 = vmatprep.subr.mxu0 %v478
    %1048 = vmatpush1.msra.mxu0 %v477
    %1049 = vmatprep.subr.mxu0 %v481
    %1050 = vmatpush1.msra.mxu0 %v480
    %1051 = vmatprep.subr.mxu0 %v484
    %1052 = vmatpush1.msra.mxu0 %v483
    %1053 = vmatprep.subr.mxu0 %v487
    %1054 = vmatpush1.msra.mxu0 %v486
    %1055 = vmatprep.subr.mxu0 %v490
    %1056 = vmatpush1.msra.mxu0 %v489
    %1057 = vmatprep.subr.mxu0 %v493
    %1058 = vmatpush1.msra.mxu0 %v492
    %1059 = vmatprep.subr.mxu0 %v496
    %1060 = vmatpush1.msra.mxu0 %v495
    %1061 = vmatprep.subr.mxu0 %v499
    %1062 = vmatpush1.msra.mxu0 %v498
    %1063 = vmatprep.subr.mxu0 %v502
    %1064 = vmatpush1.msra.mxu0 %v501
    %1065 = vmatprep.subr.mxu0 %v505
    %1066 = vmatpush1.msra.mxu0 %v504
    %1067 = vmatprep.subr.mxu0 %v508
    %1068 = vmatpush1.msra.mxu0 %v507
    %1069 = vmatprep.subr.mxu0 0.0
    %1070 = vmatpush1.msra.mxu0 0.0
    %1071 = vmatprep.subr.mxu0 0.0
    %1072 = vmatpush1.msra.mxu0 0.0
    %1073 = vmatprep.subr.mxu0 0.0
    %1074 = vmatpush1.msra.mxu0 0.0
    %1075 = vmatprep.subr.mxu0 0.0
    %1076 = vmatpush1.msra.mxu0 0.0
    %1077 = vmatprep.subr.mxu0 0.0
    %1078 = vmatpush1.msra.mxu0 0.0
    %1079 = vmatprep.subr.mxu0 0.0
    %1080 = vmatpush1.msra.mxu0 0.0
    %1081 = vmatprep.subr.mxu0 0.0
    %1082 = vmatpush1.msra.mxu0 0.0
    %1083 = vmatprep.subr.mxu0 0.0
    %1084 = vmatpush1.msra.mxu0 0.0
    %1085 = vmatprep.subr.mxu0 0.0
    %1086 = vmatpush1.msra.mxu0 0.0
    %1087 = vmatprep.subr.mxu0 0.0
    %1088 = vmatpush1.msra.mxu0 0.0
    %1089 = vmatprep.subr.mxu0 0.0
    %1090 = vmatpush1.msra.mxu0 0.0
    %1091 = vmatprep.subr.mxu0 0.0
    %1092 = vmatpush1.msra.mxu0 0.0
    %1093 = vmatprep.subr.mxu0 0.0
    %1094 = vmatpush1.msra.mxu0 0.0
    %1095 = vmatprep.subr.mxu0 0.0
    %1096 = vmatpush1.msra.mxu0 0.0
    %1097 = vmatprep.subr.mxu0 0.0
    %1098 = vmatpush1.msra.mxu0 0.0
    %1099 = vmatprep.subr.mxu0 0.0
    %1100 = vmatpush1.msra.mxu0 0.0
    %1101 = vmatprep.mubr.f32.mxu0 0.0
    %1102 = vmatmul.mubr.f32.gmra.mrb[0].mxu0 %v1031
    %v1103 = vpop.f32.mrb[0].mxu0
    %v1104 = vadd.f32 0.0, %v1103
    %v1105 = vpop.f32.mrb[0].mxu0
    %v1106 = vadd.f32 0.0, %v1105
    %1107 = vdwg.mxu0
    %1108 = vmatprep.subr.mxu0 0.0
    %1109 = vmatpush1.msra.mxu0 %v464
    %1110 = vmatprep.subr.mxu0 0.0
    %1111 = vmatpush1.msra.mxu0 %v467
    %1112 = vmatprep.subr.mxu0 0.0
    %1113 = vmatpush1.msra.mxu0 %v470
    %1114 = vmatprep.subr.mxu0 0.0
    %1115 = vmatpush1.msra.mxu0 %v473
    %1116 = vmatprep.subr.mxu0 0.0
    %1117 = vmatpush1.msra.mxu0 %v476
    %1118 = vmatprep.subr.mxu0 0.0
    %1119 = vmatpush1.msra.mxu0 %v479
    %1120 = vmatprep.subr.mxu0 0.0
    %1121 = vmatpush1.msra.mxu0 %v482
    %1122 = vmatprep.subr.mxu0 0.0
    %1123 = vmatpush1.msra.mxu0 %v485
    %1124 = vmatprep.subr.mxu0 0.0
    %1125 = vmatpush1.msra.mxu0 %v488
    %1126 = vmatprep.subr.mxu0 0.0
    %1127 = vmatpush1.msra.mxu0 %v491
    %1128 = vmatprep.subr.mxu0 0.0
    %1129 = vmatpush1.msra.mxu0 %v494
    %1130 = vmatprep.subr.mxu0 0.0
    %1131 = vmatpush1.msra.mxu0 %v497
    %1132 = vmatprep.subr.mxu0 0.0
    %1133 = vmatpush1.msra.mxu0 %v500
    %1134 = vmatprep.subr.mxu0 0.0
    %1135 = vmatpush1.msra.mxu0 %v503
    %1136 = vmatprep.subr.mxu0 0.0
    %1137 = vmatpush1.msra.mxu0 %v506
    %1138 = vmatprep.subr.mxu0 0.0
    %1139 = vmatpush1.msra.mxu0 %v509
    %1140 = vmatprep.subr.mxu0 0.0
    %1141 = vmatpush1.msra.mxu0 0.0
    %1142 = vmatprep.subr.mxu0 0.0
    %1143 = vmatpush1.msra.mxu0 0.0
    %1144 = vmatprep.subr.mxu0 0.0
    %1145 = vmatpush1.msra.mxu0 0.0
    %1146 = vmatprep.subr.mxu0 0.0
    %1147 = vmatpush1.msra.mxu0 0.0
    %1148 = vmatprep.subr.mxu0 0.0
    %1149 = vmatpush1.msra.mxu0 0.0
    %1150 = vmatprep.subr.mxu0 0.0
    %1151 = vmatpush1.msra.mxu0 0.0
    %1152 = vmatprep.subr.mxu0 0.0
    %1153 = vmatpush1.msra.mxu0 0.0
    %1154 = vmatprep.subr.mxu0 0.0
    %1155 = vmatpush1.msra.mxu0 0.0
    %1156 = vmatprep.subr.mxu0 0.0
    %1157 = vmatpush1.msra.mxu0 0.0
    %1158 = vmatprep.subr.mxu0 0.0
    %1159 = vmatpush1.msra.mxu0 0.0
    %1160 = vmatprep.subr.mxu0 0.0
    %1161 = vmatpush1.msra.mxu0 0.0
    %1162 = vmatprep.subr.mxu0 0.0
    %1163 = vmatpush1.msra.mxu0 0.0
    %1164 = vmatprep.subr.mxu0 0.0
    %1165 = vmatpush1.msra.mxu0 0.0
    %1166 = vmatprep.subr.mxu0 0.0
    %1167 = vmatpush1.msra.mxu0 0.0
    %1168 = vmatprep.subr.mxu0 0.0
    %1169 = vmatpush1.msra.mxu0 0.0
    %1170 = vmatprep.subr.mxu0 0.0
    %1171 = vmatpush1.msra.mxu0 0.0
    %1172 = vmatprep.mubr.f32.mxu0 0.0
    %1173 = vmatmul.mubr.f32.gmra.mrb[0].mxu0 %v1031
    %v1174 = vpop.f32.mrb[0].mxu0
    %v1175 = vadd.f32 0.0, %v1174
    %v1176 = vpop.f32.mrb[0].mxu0
    %1177 = vdwg.mxu0
    %v1178 = vadd.f32 %v1034, %v1104
    %v1179 = vxor.u32 %v1178, 2147483648
    %v1180 = vmul.f32 %v1179, 1.442695
    %v1181 = vpow.pop %v1180
    %v1182 = vadd.f32 %v1181, 1.0
    %v1183 = vrcp.pop %v1182
    %v1184 = vmul.f32 1.0, %v1183
    %v1185 = vadd.f32 %v1035, %v1106
    %v1186 = vxor.u32 %v1185, 2147483648
    %v1187 = vmul.f32 %v1186, 1.442695
    %v1188 = vpow.pop %v1187
    %v1189 = vadd.f32 %v1188, 1.0
    %v1190 = vrcp.pop %v1189
    %v1191 = vmul.f32 1.0, %v1190
    %v1192 = vadd.f32 %v1175, %v673
    %v1193 = vmul.f32 %v1184, %v1192
    %v1194 = vadd.f32 %v1036, %v1193
    %v1195 = vtanh.pop %v1194
    %v1196 = vsub.f32 1.0, %v1191
    %v1197 = vmul.f32 %v1196, %v1195
    %v1198 = vmul.f32 %v1191, %v1031
    %v1199 = vadd.f32 %v1197, %v1198
    %v1200 = vsel %vm460, 3, 4
    %vm1201 = vcmp.lt.s32.totalorder %v1200, %v686
    %v1202 = vsel %vm1201, %v1199, 0.0
    %v1203 = vsel %vm1201, %v1199, %v1031
    %s1204 = scalar_lea.vmem [#allocation9], 24
    %1205 = vst [vmem:[%s1204] sm:$0xff] %v1202
    %v1206 = vld [vmem:[%s435] sm:$0xff]
    %v1207 = vld [vmem:[%s435 + $0x8] sm:$0xff]
    %v1208 = vld [vmem:[%s435 + $0x10] sm:$0xff]
    %1209 = vmatprep.subr.mxu0 %v463
    %1210 = vmatpush1.msra.mxu0 %v462
    %1211 = vmatprep.subr.mxu0 %v466
    %1212 = vmatpush1.msra.mxu0 %v465
    %1213 = vmatprep.subr.mxu0 %v469
    %1214 = vmatpush1.msra.mxu0 %v468
    %1215 = vmatprep.subr.mxu0 %v472
    %1216 = vmatpush1.msra.mxu0 %v471
    %1217 = vmatprep.subr.mxu0 %v475
    %1218 = vmatpush1.msra.mxu0 %v474
    %1219 = vmatprep.subr.mxu0 %v478
    %1220 = vmatpush1.msra.mxu0 %v477
    %1221 = vmatprep.subr.mxu0 %v481
    %1222 = vmatpush1.msra.mxu0 %v480
    %1223 = vmatprep.subr.mxu0 %v484
    %1224 = vmatpush1.msra.mxu0 %v483
    %1225 = vmatprep.subr.mxu0 %v487
    %1226 = vmatpush1.msra.mxu0 %v486
    %1227 = vmatprep.subr.mxu0 %v490
    %1228 = vmatpush1.msra.mxu0 %v489
    %1229 = vmatprep.subr.mxu0 %v493
    %1230 = vmatpush1.msra.mxu0 %v492
    %1231 = vmatprep.subr.mxu0 %v496
    %1232 = vmatpush1.msra.mxu0 %v495
    %1233 = vmatprep.subr.mxu0 %v499
    %1234 = vmatpush1.msra.mxu0 %v498
    %1235 = vmatprep.subr.mxu0 %v502
    %1236 = vmatpush1.msra.mxu0 %v501
    %1237 = vmatprep.subr.mxu0 %v505
    %1238 = vmatpush1.msra.mxu0 %v504
    %1239 = vmatprep.subr.mxu0 %v508
    %1240 = vmatpush1.msra.mxu0 %v507
    %1241 = vmatprep.subr.mxu0 0.0
    %1242 = vmatpush1.msra.mxu0 0.0
    %1243 = vmatprep.subr.mxu0 0.0
    %1244 = vmatpush1.msra.mxu0 0.0
    %1245 = vmatprep.subr.mxu0 0.0
    %1246 = vmatpush1.msra.mxu0 0.0
    %1247 = vmatprep.subr.mxu0 0.0
    %1248 = vmatpush1.msra.mxu0 0.0
    %1249 = vmatprep.subr.mxu0 0.0
    %1250 = vmatpush1.msra.mxu0 0.0
    %1251 = vmatprep.subr.mxu0 0.0
    %1252 = vmatpush1.msra.mxu0 0.0
    %1253 = vmatprep.subr.mxu0 0.0
    %1254 = vmatpush1.msra.mxu0 0.0
    %1255 = vmatprep.subr.mxu0 0.0
    %1256 = vmatpush1.msra.mxu0 0.0
    %1257 = vmatprep.subr.mxu0 0.0
    %1258 = vmatpush1.msra.mxu0 0.0
    %1259 = vmatprep.subr.mxu0 0.0
    %1260 = vmatpush1.msra.mxu0 0.0
    %1261 = vmatprep.subr.mxu0 0.0
    %1262 = vmatpush1.msra.mxu0 0.0
    %1263 = vmatprep.subr.mxu0 0.0
    %1264 = vmatpush1.msra.mxu0 0.0
    %1265 = vmatprep.subr.mxu0 0.0
    %1266 = vmatpush1.msra.mxu0 0.0
    %1267 = vmatprep.subr.mxu0 0.0
    %1268 = vmatpush1.msra.mxu0 0.0
    %1269 = vmatprep.subr.mxu0 0.0
    %1270 = vmatpush1.msra.mxu0 0.0
    %1271 = vmatprep.subr.mxu0 0.0
    %1272 = vmatpush1.msra.mxu0 0.0
    %1273 = vmatprep.mubr.f32.mxu0 0.0
    %1274 = vmatmul.mubr.f32.gmra.mrb[0].mxu0 %v1203
    %v1275 = vpop.f32.mrb[0].mxu0
    %v1276 = vadd.f32 0.0, %v1275
    %v1277 = vpop.f32.mrb[0].mxu0
    %v1278 = vadd.f32 0.0, %v1277
    %1279 = vdwg.mxu0
    %1280 = vmatprep.subr.mxu0 0.0
    %1281 = vmatpush1.msra.mxu0 %v464
    %1282 = vmatprep.subr.mxu0 0.0
    %1283 = vmatpush1.msra.mxu0 %v467
    %1284 = vmatprep.subr.mxu0 0.0
    %1285 = vmatpush1.msra.mxu0 %v470
    %1286 = vmatprep.subr.mxu0 0.0
    %1287 = vmatpush1.msra.mxu0 %v473
    %1288 = vmatprep.subr.mxu0 0.0
    %1289 = vmatpush1.msra.mxu0 %v476
    %1290 = vmatprep.subr.mxu0 0.0
    %1291 = vmatpush1.msra.mxu0 %v479
    %1292 = vmatprep.subr.mxu0 0.0
    %1293 = vmatpush1.msra.mxu0 %v482
    %1294 = vmatprep.subr.mxu0 0.0
    %1295 = vmatpush1.msra.mxu0 %v485
    %1296 = vmatprep.subr.mxu0 0.0
    %1297 = vmatpush1.msra.mxu0 %v488
    %1298 = vmatprep.subr.mxu0 0.0
    %1299 = vmatpush1.msra.mxu0 %v491
    %1300 = vmatprep.subr.mxu0 0.0
    %1301 = vmatpush1.msra.mxu0 %v494
    %1302 = vmatprep.subr.mxu0 0.0
    %1303 = vmatpush1.msra.mxu0 %v497
    %1304 = vmatprep.subr.mxu0 0.0
    %1305 = vmatpush1.msra.mxu0 %v500
    %1306 = vmatprep.subr.mxu0 0.0
    %1307 = vmatpush1.msra.mxu0 %v503
    %1308 = vmatprep.subr.mxu0 0.0
    %1309 = vmatpush1.msra.mxu0 %v506
    %1310 = vmatprep.subr.mxu0 0.0
    %1311 = vmatpush1.msra.mxu0 %v509
    %1312 = vmatprep.subr.mxu0 0.0
    %1313 = vmatpush1.msra.mxu0 0.0
    %1314 = vmatprep.subr.mxu0 0.0
    %1315 = vmatpush1.msra.mxu0 0.0
    %1316 = vmatprep.subr.mxu0 0.0
    %1317 = vmatpush1.msra.mxu0 0.0
    %1318 = vmatprep.subr.mxu0 0.0
    %1319 = vmatpush1.msra.mxu0 0.0
    %1320 = vmatprep.subr.mxu0 0.0
    %1321 = vmatpush1.msra.mxu0 0.0
    %1322 = vmatprep.subr.mxu0 0.0
    %1323 = vmatpush1.msra.mxu0 0.0
    %1324 = vmatprep.subr.mxu0 0.0
    %1325 = vmatpush1.msra.mxu0 0.0
    %1326 = vmatprep.subr.mxu0 0.0
    %1327 = vmatpush1.msra.mxu0 0.0
    %1328 = vmatprep.subr.mxu0 0.0
    %1329 = vmatpush1.msra.mxu0 0.0
    %1330 = vmatprep.subr.mxu0 0.0
    %1331 = vmatpush1.msra.mxu0 0.0
    %1332 = vmatprep.subr.mxu0 0.0
    %1333 = vmatpush1.msra.mxu0 0.0
    %1334 = vmatprep.subr.mxu0 0.0
    %1335 = vmatpush1.msra.mxu0 0.0
    %1336 = vmatprep.subr.mxu0 0.0
    %1337 = vmatpush1.msra.mxu0 0.0
    %1338 = vmatprep.subr.mxu0 0.0
    %1339 = vmatpush1.msra.mxu0 0.0
    %1340 = vmatprep.subr.mxu0 0.0
    %1341 = vmatpush1.msra.mxu0 0.0
    %1342 = vmatprep.subr.mxu0 0.0
    %1343 = vmatpush1.msra.mxu0 0.0
    %1344 = vmatprep.mubr.f32.mxu0 0.0
    %1345 = vmatmul.mubr.f32.gmra.mrb[0].mxu0 %v1203
    %v1346 = vpop.f32.mrb[0].mxu0
    %v1347 = vadd.f32 0.0, %v1346
    %v1348 = vpop.f32.mrb[0].mxu0
    %1349 = vdwg.mxu0
    %v1350 = vadd.f32 %v1206, %v1276
    %v1351 = vxor.u32 %v1350, 2147483648
    %v1352 = vmul.f32 %v1351, 1.442695
    %v1353 = vpow.pop %v1352
    %v1354 = vadd.f32 %v1353, 1.0
    %v1355 = vrcp.pop %v1354
    %v1356 = vmul.f32 1.0, %v1355
    %v1357 = vadd.f32 %v1207, %v1278
    %v1358 = vxor.u32 %v1357, 2147483648
    %v1359 = vmul.f32 %v1358, 1.442695
    %v1360 = vpow.pop %v1359
    %v1361 = vadd.f32 %v1360, 1.0
    %v1362 = vrcp.pop %v1361
    %v1363 = vmul.f32 1.0, %v1362
    %v1364 = vadd.f32 %v1347, %v673
    %v1365 = vmul.f32 %v1356, %v1364
    %v1366 = vadd.f32 %v1208, %v1365
    %v1367 = vtanh.pop %v1366
    %v1368 = vsub.f32 1.0, %v1363
    %v1369 = vmul.f32 %v1368, %v1367
    %v1370 = vmul.f32 %v1363, %v1203
    %v1371 = vadd.f32 %v1369, %v1370
    %v1372 = vsel %vm460, 4, 3
    %vm1373 = vcmp.lt.s32.totalorder %v1372, %v686
    %v1374 = vsel %vm1373, %v1371, 0.0
    %v1375 = vsel %vm1373, %v1371, %v1203
    %s1376 = scalar_lea.vmem [#allocation9], 32
    %1377 = vst [vmem:[%s1376] sm:$0xff] %v1374
    %v1378 = vld [vmem:[%s442] sm:$0xff]
    %v1379 = vld [vmem:[%s442 + $0x8] sm:$0xff]
    %v1380 = vld [vmem:[%s442 + $0x10] sm:$0xff]
    %1381 = vmatprep.subr.mxu0 %v463
    %1382 = vmatpush1.msra.mxu0 %v462
    %1383 = vmatprep.subr.mxu0 %v466
    %1384 = vmatpush1.msra.mxu0 %v465
    %1385 = vmatprep.subr.mxu0 %v469
    %1386 = vmatpush1.msra.mxu0 %v468
    %1387 = vmatprep.subr.mxu0 %v472
    %1388 = vmatpush1.msra.mxu0 %v471
    %1389 = vmatprep.subr.mxu0 %v475
    %1390 = vmatpush1.msra.mxu0 %v474
    %1391 = vmatprep.subr.mxu0 %v478
    %1392 = vmatpush1.msra.mxu0 %v477
    %1393 = vmatprep.subr.mxu0 %v481
    %1394 = vmatpush1.msra.mxu0 %v480
    %1395 = vmatprep.subr.mxu0 %v484
    %1396 = vmatpush1.msra.mxu0 %v483
    %1397 = vmatprep.subr.mxu0 %v487
    %1398 = vmatpush1.msra.mxu0 %v486
    %1399 = vmatprep.subr.mxu0 %v490
    %1400 = vmatpush1.msra.mxu0 %v489
    %1401 = vmatprep.subr.mxu0 %v493
    %1402 = vmatpush1.msra.mxu0 %v492
    %1403 = vmatprep.subr.mxu0 %v496
    %1404 = vmatpush1.msra.mxu0 %v495
    %1405 = vmatprep.subr.mxu0 %v499
    %1406 = vmatpush1.msra.mxu0 %v498
    %1407 = vmatprep.subr.mxu0 %v502
    %1408 = vmatpush1.msra.mxu0 %v501
    %1409 = vmatprep.subr.mxu0 %v505
    %1410 = vmatpush1.msra.mxu0 %v504
    %1411 = vmatprep.subr.mxu0 %v508
    %1412 = vmatpush1.msra.mxu0 %v507
    %1413 = vmatprep.subr.mxu0 0.0
    %1414 = vmatpush1.msra.mxu0 0.0
    %1415 = vmatprep.subr.mxu0 0.0
    %1416 = vmatpush1.msra.mxu0 0.0
    %1417 = vmatprep.subr.mxu0 0.0
    %1418 = vmatpush1.msra.mxu0 0.0
    %1419 = vmatprep.subr.mxu0 0.0
    %1420 = vmatpush1.msra.mxu0 0.0
    %1421 = vmatprep.subr.mxu0 0.0
    %1422 = vmatpush1.msra.mxu0 0.0
    %1423 = vmatprep.subr.mxu0 0.0
    %1424 = vmatpush1.msra.mxu0 0.0
    %1425 = vmatprep.subr.mxu0 0.0
    %1426 = vmatpush1.msra.mxu0 0.0
    %1427 = vmatprep.subr.mxu0 0.0
    %1428 = vmatpush1.msra.mxu0 0.0
    %1429 = vmatprep.subr.mxu0 0.0
    %1430 = vmatpush1.msra.mxu0 0.0
    %1431 = vmatprep.subr.mxu0 0.0
    %1432 = vmatpush1.msra.mxu0 0.0
    %1433 = vmatprep.subr.mxu0 0.0
    %1434 = vmatpush1.msra.mxu0 0.0
    %1435 = vmatprep.subr.mxu0 0.0
    %1436 = vmatpush1.msra.mxu0 0.0
    %1437 = vmatprep.subr.mxu0 0.0
    %1438 = vmatpush1.msra.mxu0 0.0
    %1439 = vmatprep.subr.mxu0 0.0
    %1440 = vmatpush1.msra.mxu0 0.0
    %1441 = vmatprep.subr.mxu0 0.0
    %1442 = vmatpush1.msra.mxu0 0.0
    %1443 = vmatprep.subr.mxu0 0.0
    %1444 = vmatpush1.msra.mxu0 0.0
    %1445 = vmatprep.mubr.f32.mxu0 0.0
    %1446 = vmatmul.mubr.f32.gmra.mrb[0].mxu0 %v1375
    %v1447 = vpop.f32.mrb[0].mxu0
    %v1448 = vadd.f32 0.0, %v1447
    %v1449 = vpop.f32.mrb[0].mxu0
    %v1450 = vadd.f32 0.0, %v1449
    %1451 = vdwg.mxu0
    %1452 = vmatprep.subr.mxu0 0.0
    %1453 = vmatpush1.msra.mxu0 %v464
    %1454 = vmatprep.subr.mxu0 0.0
    %1455 = vmatpush1.msra.mxu0 %v467
    %1456 = vmatprep.subr.mxu0 0.0
    %1457 = vmatpush1.msra.mxu0 %v470
    %1458 = vmatprep.subr.mxu0 0.0
    %1459 = vmatpush1.msra.mxu0 %v473
    %1460 = vmatprep.subr.mxu0 0.0
    %1461 = vmatpush1.msra.mxu0 %v476
    %1462 = vmatprep.subr.mxu0 0.0
    %1463 = vmatpush1.msra.mxu0 %v479
    %1464 = vmatprep.subr.mxu0 0.0
    %1465 = vmatpush1.msra.mxu0 %v482
    %1466 = vmatprep.subr.mxu0 0.0
    %1467 = vmatpush1.msra.mxu0 %v485
    %1468 = vmatprep.subr.mxu0 0.0
    %1469 = vmatpush1.msra.mxu0 %v488
    %1470 = vmatprep.subr.mxu0 0.0
    %1471 = vmatpush1.msra.mxu0 %v491
    %1472 = vmatprep.subr.mxu0 0.0
    %1473 = vmatpush1.msra.mxu0 %v494
    %1474 = vmatprep.subr.mxu0 0.0
    %1475 = vmatpush1.msra.mxu0 %v497
    %1476 = vmatprep.subr.mxu0 0.0
    %1477 = vmatpush1.msra.mxu0 %v500
    %1478 = vmatprep.subr.mxu0 0.0
    %1479 = vmatpush1.msra.mxu0 %v503
    %1480 = vmatprep.subr.mxu0 0.0
    %1481 = vmatpush1.msra.mxu0 %v506
    %1482 = vmatprep.subr.mxu0 0.0
    %1483 = vmatpush1.msra.mxu0 %v509
    %1484 = vmatprep.subr.mxu0 0.0
    %1485 = vmatpush1.msra.mxu0 0.0
    %1486 = vmatprep.subr.mxu0 0.0
    %1487 = vmatpush1.msra.mxu0 0.0
    %1488 = vmatprep.subr.mxu0 0.0
    %1489 = vmatpush1.msra.mxu0 0.0
    %1490 = vmatprep.subr.mxu0 0.0
    %1491 = vmatpush1.msra.mxu0 0.0
    %1492 = vmatprep.subr.mxu0 0.0
    %1493 = vmatpush1.msra.mxu0 0.0
    %1494 = vmatprep.subr.mxu0 0.0
    %1495 = vmatpush1.msra.mxu0 0.0
    %1496 = vmatprep.subr.mxu0 0.0
    %1497 = vmatpush1.msra.mxu0 0.0
    %1498 = vmatprep.subr.mxu0 0.0
    %1499 = vmatpush1.msra.mxu0 0.0
    %1500 = vmatprep.subr.mxu0 0.0
    %1501 = vmatpush1.msra.mxu0 0.0
    %1502 = vmatprep.subr.mxu0 0.0
    %1503 = vmatpush1.msra.mxu0 0.0
    %1504 = vmatprep.subr.mxu0 0.0
    %1505 = vmatpush1.msra.mxu0 0.0
    %1506 = vmatprep.subr.mxu0 0.0
    %1507 = vmatpush1.msra.mxu0 0.0
    %1508 = vmatprep.subr.mxu0 0.0
    %1509 = vmatpush1.msra.mxu0 0.0
    %1510 = vmatprep.subr.mxu0 0.0
    %1511 = vmatpush1.msra.mxu0 0.0
    %1512 = vmatprep.subr.mxu0 0.0
    %1513 = vmatpush1.msra.mxu0 0.0
    %1514 = vmatprep.subr.mxu0 0.0
    %1515 = vmatpush1.msra.mxu0 0.0
    %1516 = vmatprep.mubr.f32.mxu0 0.0
    %1517 = vmatmul.mubr.f32.gmra.mrb[0].mxu0 %v1375
    %v1518 = vpop.f32.mrb[0].mxu0
    %v1519 = vadd.f32 0.0, %v1518
    %v1520 = vpop.f32.mrb[0].mxu0
    %1521 = vdwg.mxu0
    %v1522 = vadd.f32 %v1378, %v1448
    %v1523 = vxor.u32 %v1522, 2147483648
    %v1524 = vmul.f32 %v1523, 1.442695
    %v1525 = vpow.pop %v1524
    %v1526 = vadd.f32 %v1525, 1.0
    %v1527 = vrcp.pop %v1526
    %v1528 = vmul.f32 1.0, %v1527
    %v1529 = vadd.f32 %v1379, %v1450
    %v1530 = vxor.u32 %v1529, 2147483648
    %v1531 = vmul.f32 %v1530, 1.442695
    %v1532 = vpow.pop %v1531
    %v1533 = vadd.f32 %v1532, 1.0
    %v1534 = vrcp.pop %v1533
    %v1535 = vmul.f32 1.0, %v1534
    %v1536 = vadd.f32 %v1519, %v673
    %v1537 = vmul.f32 %v1528, %v1536
    %v1538 = vadd.f32 %v1380, %v1537
    %v1539 = vtanh.pop %v1538
    %v1540 = vsub.f32 1.0, %v1535
    %v1541 = vmul.f32 %v1540, %v1539
    %v1542 = vmul.f32 %v1535, %v1375
    %v1543 = vadd.f32 %v1541, %v1542
    %v1544 = vsel %vm460, 5, 2
    %vm1545 = vcmp.lt.s32.totalorder %v1544, %v686
    %v1546 = vsel %vm1545, %v1543, 0.0
    %v1547 = vsel %vm1545, %v1543, %v1375
    %s1548 = scalar_lea.vmem [#allocation9], 40
    %1549 = vst [vmem:[%s1548] sm:$0xff] %v1546
    %v1550 = vld [vmem:[%s449] sm:$0xff]
    %v1551 = vld [vmem:[%s449 + $0x8] sm:$0xff]
    %v1552 = vld [vmem:[%s449 + $0x10] sm:$0xff]
    %1553 = vmatprep.subr.mxu0 %v463
    %1554 = vmatpush1.msra.mxu0 %v462
    %1555 = vmatprep.subr.mxu0 %v466
    %1556 = vmatpush1.msra.mxu0 %v465
    %1557 = vmatprep.subr.mxu0 %v469
    %1558 = vmatpush1.msra.mxu0 %v468
    %1559 = vmatprep.subr.mxu0 %v472
    %1560 = vmatpush1.msra.mxu0 %v471
    %1561 = vmatprep.subr.mxu0 %v475
    %1562 = vmatpush1.msra.mxu0 %v474
    %1563 = vmatprep.subr.mxu0 %v478
    %1564 = vmatpush1.msra.mxu0 %v477
    %1565 = vmatprep.subr.mxu0 %v481
    %1566 = vmatpush1.msra.mxu0 %v480
    %1567 = vmatprep.subr.mxu0 %v484
    %1568 = vmatpush1.msra.mxu0 %v483
    %1569 = vmatprep.subr.mxu0 %v487
    %1570 = vmatpush1.msra.mxu0 %v486
    %1571 = vmatprep.subr.mxu0 %v490
    %1572 = vmatpush1.msra.mxu0 %v489
    %1573 = vmatprep.subr.mxu0 %v493
    %1574 = vmatpush1.msra.mxu0 %v492
    %1575 = vmatprep.subr.mxu0 %v496
    %1576 = vmatpush1.msra.mxu0 %v495
    %1577 = vmatprep.subr.mxu0 %v499
    %1578 = vmatpush1.msra.mxu0 %v498
    %1579 = vmatprep.subr.mxu0 %v502
    %1580 = vmatpush1.msra.mxu0 %v501
    %1581 = vmatprep.subr.mxu0 %v505
    %1582 = vmatpush1.msra.mxu0 %v504
    %1583 = vmatprep.subr.mxu0 %v508
    %1584 = vmatpush1.msra.mxu0 %v507
    %1585 = vmatprep.subr.mxu0 0.0
    %1586 = vmatpush1.msra.mxu0 0.0
    %1587 = vmatprep.subr.mxu0 0.0
    %1588 = vmatpush1.msra.mxu0 0.0
    %1589 = vmatprep.subr.mxu0 0.0
    %1590 = vmatpush1.msra.mxu0 0.0
    %1591 = vmatprep.subr.mxu0 0.0
    %1592 = vmatpush1.msra.mxu0 0.0
    %1593 = vmatprep.subr.mxu0 0.0
    %1594 = vmatpush1.msra.mxu0 0.0
    %1595 = vmatprep.subr.mxu0 0.0
    %1596 = vmatpush1.msra.mxu0 0.0
    %1597 = vmatprep.subr.mxu0 0.0
    %1598 = vmatpush1.msra.mxu0 0.0
    %1599 = vmatprep.subr.mxu0 0.0
    %1600 = vmatpush1.msra.mxu0 0.0
    %1601 = vmatprep.subr.mxu0 0.0
    %1602 = vmatpush1.msra.mxu0 0.0
    %1603 = vmatprep.subr.mxu0 0.0
    %1604 = vmatpush1.msra.mxu0 0.0
    %1605 = vmatprep.subr.mxu0 0.0
    %1606 = vmatpush1.msra.mxu0 0.0
    %1607 = vmatprep.subr.mxu0 0.0
    %1608 = vmatpush1.msra.mxu0 0.0
    %1609 = vmatprep.subr.mxu0 0.0
    %1610 = vmatpush1.msra.mxu0 0.0
    %1611 = vmatprep.subr.mxu0 0.0
    %1612 = vmatpush1.msra.mxu0 0.0
    %1613 = vmatprep.subr.mxu0 0.0
    %1614 = vmatpush1.msra.mxu0 0.0
    %1615 = vmatprep.subr.mxu0 0.0
    %1616 = vmatpush1.msra.mxu0 0.0
    %1617 = vmatprep.mubr.f32.mxu0 0.0
    %1618 = vmatmul.mubr.f32.gmra.mrb[0].mxu0 %v1547
    %v1619 = vpop.f32.mrb[0].mxu0
    %v1620 = vadd.f32 0.0, %v1619
    %v1621 = vpop.f32.mrb[0].mxu0
    %v1622 = vadd.f32 0.0, %v1621
    %1623 = vdwg.mxu0
    %1624 = vmatprep.subr.mxu0 0.0
    %1625 = vmatpush1.msra.mxu0 %v464
    %1626 = vmatprep.subr.mxu0 0.0
    %1627 = vmatpush1.msra.mxu0 %v467
    %1628 = vmatprep.subr.mxu0 0.0
    %1629 = vmatpush1.msra.mxu0 %v470
    %1630 = vmatprep.subr.mxu0 0.0
    %1631 = vmatpush1.msra.mxu0 %v473
    %1632 = vmatprep.subr.mxu0 0.0
    %1633 = vmatpush1.msra.mxu0 %v476
    %1634 = vmatprep.subr.mxu0 0.0
    %1635 = vmatpush1.msra.mxu0 %v479
    %1636 = vmatprep.subr.mxu0 0.0
    %1637 = vmatpush1.msra.mxu0 %v482
    %1638 = vmatprep.subr.mxu0 0.0
    %1639 = vmatpush1.msra.mxu0 %v485
    %1640 = vmatprep.subr.mxu0 0.0
    %1641 = vmatpush1.msra.mxu0 %v488
    %1642 = vmatprep.subr.mxu0 0.0
    %1643 = vmatpush1.msra.mxu0 %v491
    %1644 = vmatprep.subr.mxu0 0.0
    %1645 = vmatpush1.msra.mxu0 %v494
    %1646 = vmatprep.subr.mxu0 0.0
    %1647 = vmatpush1.msra.mxu0 %v497
    %1648 = vmatprep.subr.mxu0 0.0
    %1649 = vmatpush1.msra.mxu0 %v500
    %1650 = vmatprep.subr.mxu0 0.0
    %1651 = vmatpush1.msra.mxu0 %v503
    %1652 = vmatprep.subr.mxu0 0.0
    %1653 = vmatpush1.msra.mxu0 %v506
    %1654 = vmatprep.subr.mxu0 0.0
    %1655 = vmatpush1.msra.mxu0 %v509
    %1656 = vmatprep.subr.mxu0 0.0
    %1657 = vmatpush1.msra.mxu0 0.0
    %1658 = vmatprep.subr.mxu0 0.0
    %1659 = vmatpush1.msra.mxu0 0.0
    %1660 = vmatprep.subr.mxu0 0.0
    %1661 = vmatpush1.msra.mxu0 0.0
    %1662 = vmatprep.subr.mxu0 0.0
    %1663 = vmatpush1.msra.mxu0 0.0
    %1664 = vmatprep.subr.mxu0 0.0
    %1665 = vmatpush1.msra.mxu0 0.0
    %1666 = vmatprep.subr.mxu0 0.0
    %1667 = vmatpush1.msra.mxu0 0.0
    %1668 = vmatprep.subr.mxu0 0.0
    %1669 = vmatpush1.msra.mxu0 0.0
    %1670 = vmatprep.subr.mxu0 0.0
    %1671 = vmatpush1.msra.mxu0 0.0
    %1672 = vmatprep.subr.mxu0 0.0
    %1673 = vmatpush1.msra.mxu0 0.0
    %1674 = vmatprep.subr.mxu0 0.0
    %1675 = vmatpush1.msra.mxu0 0.0
    %1676 = vmatprep.subr.mxu0 0.0
    %1677 = vmatpush1.msra.mxu0 0.0
    %1678 = vmatprep.subr.mxu0 0.0
    %1679 = vmatpush1.msra.mxu0 0.0
    %1680 = vmatprep.subr.mxu0 0.0
    %1681 = vmatpush1.msra.mxu0 0.0
    %1682 = vmatprep.subr.mxu0 0.0
    %1683 = vmatpush1.msra.mxu0 0.0
    %1684 = vmatprep.subr.mxu0 0.0
    %1685 = vmatpush1.msra.mxu0 0.0
    %1686 = vmatprep.subr.mxu0 0.0
    %1687 = vmatpush1.msra.mxu0 0.0
    %1688 = vmatprep.mubr.f32.mxu0 0.0
    %1689 = vmatmul.mubr.f32.gmra.mrb[0].mxu0 %v1547
    %v1690 = vpop.f32.mrb[0].mxu0
    %v1691 = vadd.f32 0.0, %v1690
    %v1692 = vpop.f32.mrb[0].mxu0
    %1693 = vdwg.mxu0
    %v1694 = vadd.f32 %v1550, %v1620
    %v1695 = vxor.u32 %v1694, 2147483648
    %v1696 = vmul.f32 %v1695, 1.442695
    %v1697 = vpow.pop %v1696
    %v1698 = vadd.f32 %v1697, 1.0
    %v1699 = vrcp.pop %v1698
    %v1700 = vmul.f32 1.0, %v1699
    %v1701 = vadd.f32 %v1551, %v1622
    %v1702 = vxor.u32 %v1701, 2147483648
    %v1703 = vmul.f32 %v1702, 1.442695
    %v1704 = vpow.pop %v1703
    %v1705 = vadd.f32 %v1704, 1.0
    %v1706 = vrcp.pop %v1705
    %v1707 = vmul.f32 1.0, %v1706
    %v1708 = vadd.f32 %v1691, %v673
    %v1709 = vmul.f32 %v1700, %v1708
    %v1710 = vadd.f32 %v1552, %v1709
    %v1711 = vtanh.pop %v1710
    %v1712 = vsub.f32 1.0, %v1707
    %v1713 = vmul.f32 %v1712, %v1711
    %v1714 = vmul.f32 %v1707, %v1547
    %v1715 = vadd.f32 %v1713, %v1714
    %v1716 = vsel %vm460, 6, 1
    %vm1717 = vcmp.lt.s32.totalorder %v1716, %v686
    %v1718 = vsel %vm1717, %v1715, 0.0
    %v1719 = vsel %vm1717, %v1715, %v1547
    %s1720 = scalar_lea.vmem [#allocation9], 48
    %1721 = vst [vmem:[%s1720] sm:$0xff] %v1718
    %v1722 = vld [vmem:[%s456] sm:$0xff]
    %v1723 = vld [vmem:[%s456 + $0x8] sm:$0xff]
    %v1724 = vld [vmem:[%s456 + $0x10] sm:$0xff]
    %1725 = vmatprep.subr.mxu0 %v463
    %1726 = vmatpush1.msra.mxu0 %v462
    %1727 = vmatprep.subr.mxu0 %v466
    %1728 = vmatpush1.msra.mxu0 %v465
    %1729 = vmatprep.subr.mxu0 %v469
    %1730 = vmatpush1.msra.mxu0 %v468
    %1731 = vmatprep.subr.mxu0 %v472
    %1732 = vmatpush1.msra.mxu0 %v471
    %1733 = vmatprep.subr.mxu0 %v475
    %1734 = vmatpush1.msra.mxu0 %v474
    %1735 = vmatprep.subr.mxu0 %v478
    %1736 = vmatpush1.msra.mxu0 %v477
    %1737 = vmatprep.subr.mxu0 %v481
    %1738 = vmatpush1.msra.mxu0 %v480
    %1739 = vmatprep.subr.mxu0 %v484
    %1740 = vmatpush1.msra.mxu0 %v483
    %1741 = vmatprep.subr.mxu0 %v487
    %1742 = vmatpush1.msra.mxu0 %v486
    %1743 = vmatprep.subr.mxu0 %v490
    %1744 = vmatpush1.msra.mxu0 %v489
    %1745 = vmatprep.subr.mxu0 %v493
    %1746 = vmatpush1.msra.mxu0 %v492
    %1747 = vmatprep.subr.mxu0 %v496
    %1748 = vmatpush1.msra.mxu0 %v495
    %1749 = vmatprep.subr.mxu0 %v499
    %1750 = vmatpush1.msra.mxu0 %v498
    %1751 = vmatprep.subr.mxu0 %v502
    %1752 = vmatpush1.msra.mxu0 %v501
    %1753 = vmatprep.subr.mxu0 %v505
    %1754 = vmatpush1.msra.mxu0 %v504
    %1755 = vmatprep.subr.mxu0 %v508
    %1756 = vmatpush1.msra.mxu0 %v507
    %1757 = vmatprep.subr.mxu0 0.0
    %1758 = vmatpush1.msra.mxu0 0.0
    %1759 = vmatprep.subr.mxu0 0.0
    %1760 = vmatpush1.msra.mxu0 0.0
    %1761 = vmatprep.subr.mxu0 0.0
    %1762 = vmatpush1.msra.mxu0 0.0
    %1763 = vmatprep.subr.mxu0 0.0
    %1764 = vmatpush1.msra.mxu0 0.0
    %1765 = vmatprep.subr.mxu0 0.0
    %1766 = vmatpush1.msra.mxu0 0.0
    %1767 = vmatprep.subr.mxu0 0.0
    %1768 = vmatpush1.msra.mxu0 0.0
    %1769 = vmatprep.subr.mxu0 0.0
    %1770 = vmatpush1.msra.mxu0 0.0
    %1771 = vmatprep.subr.mxu0 0.0
    %1772 = vmatpush1.msra.mxu0 0.0
    %1773 = vmatprep.subr.mxu0 0.0
    %1774 = vmatpush1.msra.mxu0 0.0
    %1775 = vmatprep.subr.mxu0 0.0
    %1776 = vmatpush1.msra.mxu0 0.0
    %1777 = vmatprep.subr.mxu0 0.0
    %1778 = vmatpush1.msra.mxu0 0.0
    %1779 = vmatprep.subr.mxu0 0.0
    %1780 = vmatpush1.msra.mxu0 0.0
    %1781 = vmatprep.subr.mxu0 0.0
    %1782 = vmatpush1.msra.mxu0 0.0
    %1783 = vmatprep.subr.mxu0 0.0
    %1784 = vmatpush1.msra.mxu0 0.0
    %1785 = vmatprep.subr.mxu0 0.0
    %1786 = vmatpush1.msra.mxu0 0.0
    %1787 = vmatprep.subr.mxu0 0.0
    %1788 = vmatpush1.msra.mxu0 0.0
    %1789 = vmatprep.mubr.f32.mxu0 0.0
    %1790 = vmatmul.mubr.f32.gmra.mrb[0].mxu0 %v1719
    %v1791 = vpop.f32.mrb[0].mxu0
    %v1792 = vadd.f32 0.0, %v1791
    %v1793 = vpop.f32.mrb[0].mxu0
    %v1794 = vadd.f32 0.0, %v1793
    %1795 = vdwg.mxu0
    %1796 = vmatprep.subr.mxu0 0.0
    %1797 = vmatpush1.msra.mxu0 %v464
    %1798 = vmatprep.subr.mxu0 0.0
    %1799 = vmatpush1.msra.mxu0 %v467
    %1800 = vmatprep.subr.mxu0 0.0
    %1801 = vmatpush1.msra.mxu0 %v470
    %1802 = vmatprep.subr.mxu0 0.0
    %1803 = vmatpush1.msra.mxu0 %v473
    %1804 = vmatprep.subr.mxu0 0.0
    %1805 = vmatpush1.msra.mxu0 %v476
    %1806 = vmatprep.subr.mxu0 0.0
    %1807 = vmatpush1.msra.mxu0 %v479
    %1808 = vmatprep.subr.mxu0 0.0
    %1809 = vmatpush1.msra.mxu0 %v482
    %1810 = vmatprep.subr.mxu0 0.0
    %1811 = vmatpush1.msra.mxu0 %v485
    %1812 = vmatprep.subr.mxu0 0.0
    %1813 = vmatpush1.msra.mxu0 %v488
    %1814 = vmatprep.subr.mxu0 0.0
    %1815 = vmatpush1.msra.mxu0 %v491
    %1816 = vmatprep.subr.mxu0 0.0
    %1817 = vmatpush1.msra.mxu0 %v494
    %1818 = vmatprep.subr.mxu0 0.0
    %1819 = vmatpush1.msra.mxu0 %v497
    %1820 = vmatprep.subr.mxu0 0.0
    %1821 = vmatpush1.msra.mxu0 %v500
    %1822 = vmatprep.subr.mxu0 0.0
    %1823 = vmatpush1.msra.mxu0 %v503
    %1824 = vmatprep.subr.mxu0 0.0
    %1825 = vmatpush1.msra.mxu0 %v506
    %1826 = vmatprep.subr.mxu0 0.0
    %1827 = vmatpush1.msra.mxu0 %v509
    %1828 = vmatprep.subr.mxu0 0.0
    %1829 = vmatpush1.msra.mxu0 0.0
    %1830 = vmatprep.subr.mxu0 0.0
    %1831 = vmatpush1.msra.mxu0 0.0
    %1832 = vmatprep.subr.mxu0 0.0
    %1833 = vmatpush1.msra.mxu0 0.0
    %1834 = vmatprep.subr.mxu0 0.0
    %1835 = vmatpush1.msra.mxu0 0.0
    %1836 = vmatprep.subr.mxu0 0.0
    %1837 = vmatpush1.msra.mxu0 0.0
    %1838 = vmatprep.subr.mxu0 0.0
    %1839 = vmatpush1.msra.mxu0 0.0
    %1840 = vmatprep.subr.mxu0 0.0
    %1841 = vmatpush1.msra.mxu0 0.0
    %1842 = vmatprep.subr.mxu0 0.0
    %1843 = vmatpush1.msra.mxu0 0.0
    %1844 = vmatprep.subr.mxu0 0.0
    %1845 = vmatpush1.msra.mxu0 0.0
    %1846 = vmatprep.subr.mxu0 0.0
    %1847 = vmatpush1.msra.mxu0 0.0
    %1848 = vmatprep.subr.mxu0 0.0
    %1849 = vmatpush1.msra.mxu0 0.0
    %1850 = vmatprep.subr.mxu0 0.0
    %1851 = vmatpush1.msra.mxu0 0.0
    %1852 = vmatprep.subr.mxu0 0.0
    %1853 = vmatpush1.msra.mxu0 0.0
    %1854 = vmatprep.subr.mxu0 0.0
    %1855 = vmatpush1.msra.mxu0 0.0
    %1856 = vmatprep.subr.mxu0 0.0
    %1857 = vmatpush1.msra.mxu0 0.0
    %1858 = vmatprep.subr.mxu0 0.0
    %1859 = vmatpush1.msra.mxu0 0.0
    %1860 = vmatprep.mubr.f32.mxu0 0.0
    %1861 = vmatmul.mubr.f32.gmra.mrb[0].mxu0 %v1719
    %v1862 = vpop.f32.mrb[0].mxu0
    %v1863 = vadd.f32 0.0, %v1862
    %v1864 = vpop.f32.mrb[0].mxu0
    %1865 = vdwg.mxu0
    %v1866 = vadd.f32 %v1722, %v1792
    %v1867 = vxor.u32 %v1866, 2147483648
    %v1868 = vmul.f32 %v1867, 1.442695
    %v1869 = vpow.pop %v1868
    %v1870 = vadd.f32 %v1869, 1.0
    %v1871 = vrcp.pop %v1870
    %v1872 = vmul.f32 1.0, %v1871
    %v1873 = vadd.f32 %v1723, %v1794
    %v1874 = vxor.u32 %v1873, 2147483648
    %v1875 = vmul.f32 %v1874, 1.442695
    %v1876 = vpow.pop %v1875
    %v1877 = vadd.f32 %v1876, 1.0
    %v1878 = vrcp.pop %v1877
    %v1879 = vmul.f32 1.0, %v1878
    %v1880 = vadd.f32 %v1863, %v673
    %v1881 = vmul.f32 %v1872, %v1880
    %v1882 = vadd.f32 %v1724, %v1881
    %v1883 = vtanh.pop %v1882
    %v1884 = vsub.f32 1.0, %v1879
    %v1885 = vmul.f32 %v1884, %v1883
    %v1886 = vmul.f32 %v1879, %v1719
    %v1887 = vadd.f32 %v1885, %v1886
    %v1888 = vsel %vm460, 7, 0
    %vm1889 = vcmp.lt.s32.totalorder %v1888, %v686
    %v1890 = vsel %vm1889, %v1887, 0.0
    %s1891 = scalar_lea.vmem [#allocation9], 56
    %1892 = vst [vmem:[%s1891] sm:$0xff] %v1890
    // Predicated region
    $region38: #{tpu_custom_call.1} parent=1 // pred_check
      _
    $region39: #{tpu_custom_call.1} parent=1 // pred_check_branch
      %1894 = sbr.rel (0) target = $region41
    $region40: #{tpu_custom_call.1} parent=1 // pred_region
      %s1896 = ssub.s32 1024, 1024
      %1897 = vsyncadd [#allocation5], %s1896
      %s1898 = sshll.u32 [#allocation9], 4
      %s1899 = int_to_ptr.vmem [resolvable:$true] %s1898
      %1904 = dma.vmem_to_hbm [thread:$0]  %s1899, 1024, %s6, [#allocation5], 128, 128, 8
    $region41: #{tpu_custom_call.1} parent=1 // pred_fallthru
      _
    // Predicated region
    $region42: #{tpu_custom_call.1} parent=1 // pred_check
      _
    $region43: #{tpu_custom_call.1} parent=1 // pred_check_branch
      %1906 = sbr.rel (0) target = $region45
    $region44: #{tpu_custom_call.1} parent=1 // pred_region
      %1907 = dma.done [#allocation5], 1024
    $region45: #{tpu_custom_call.1} parent=1 // pred_fallthru
      _
    %1908 = vsyncpa [#allocation4], 1
    %1909 = vsyncpa [#allocation7], 1
    %1910 = vsyncpa [#allocation5], 1

</llo_original>
